<compile_context>
chip_gen: v6e
topology: v6e:2x2x1
jax: 0.10.0
libtpu: 0.0.40
codegen_flags: <defaults>
</compile_context>

<pallas_src>
import jax
import jax.numpy as jnp
from jax import lax
from jax.experimental import pallas as pl
from jax.experimental.pallas import tpu as pltpu

SLOPE = 0.01


def make_kernel(C, H, W, slope):
    HW = H * W

    def kernel(xcol_ref, x_ref, w1_ref, b1_ref, w2_ref, b2_ref, w3_ref, b3_ref,
               o_ref):
        f32 = jnp.float32

        # ---- conv1 (1x1): channel contraction, lane dim = H*W ----
        a = jnp.dot(w1_ref[...], x_ref[0].astype(f32),
                    preferred_element_type=f32) + b1_ref[...]
        a = jnp.where(a > 0, a, slope * a)

        # ---- conv2 (3x3, stride 1, pad 1) ----
        # 9 taps built with XLU lane rolls of the flat (C, H*W) activation plus
        # boundary masks (top/bottom rows via the flat index, left/right columns via
        # the precomputed column-index vector).  Each tap feeds a (C,C)@(C,HW) matmul.
        p = lax.broadcasted_iota(jnp.int32, (1, HW), 1)   # flat index y*W + x
        xc = xcol_ref[...]                                # column index x, (1, HW)

        acc = jnp.zeros((C, HW), f32)
        for ky in range(3):
            for kx in range(3):
                s = (ky - 1) * W + (kx - 1)               # source offset in flat idx
                tap = a if s == 0 else pltpu.roll(a, (-s) % HW, axis=1)
                conds = []
                if ky == 0:
                    conds.append(p >= W)                  # y - 1 >= 0
                elif ky == 2:
                    conds.append(p < (H - 1) * W)         # y + 1 <  H
                if kx == 0:
                    conds.append(xc >= 1)                 # x - 1 >= 0
                elif kx == 2:
                    conds.append(xc <= W - 2)             # x + 1 <  W
                if conds:
                    m = conds[0]
                    for extra in conds[1:]:
                        m = jnp.logical_and(m, extra)
                    tap = jnp.where(m, tap, 0.0)
                acc = acc + jnp.dot(w2_ref[3 * ky + kx], tap,
                                    preferred_element_type=f32)
        a2 = acc + b2_ref[...]
        a2 = jnp.where(a2 > 0, a2, slope * a2)

        # ---- conv3 (1x1) + residual; lane-dense store (last dim = H*W) ----
        out = jnp.dot(w3_ref[...], a2, preferred_element_type=f32) + b3_ref[...]
        o_ref[0] = (x_ref[0].astype(f32) + out).astype(o_ref.dtype)

    return kernel


def res_bottleneck_block(x_nchw, wc1, b1, wc2, b2, wc3, b3, slope=SLOPE):
    """PyTorch-convention params: wc1/wc3 (C,C,1,1), wc2 (C,C,3,3) OIHW; biases (C,)."""
    N, C, H, W = x_nchw.shape
    HW = H * W
    if slope < 1e-4:            # module switches to plain ReLU in this case
        slope = 0.0

    # Repack weights for the NCHW-flat kernel.
    w1k = wc1[:, :, 0, 0]                                        # (Cout, Cin)
    w2k = jnp.transpose(wc2, (2, 3, 0, 1)).reshape(9, C, C)      # (tap, Cout, Cin)
    w3k = wc3[:, :, 0, 0]                                        # (Cout, Cin)
    b1k, b2k, b3k = b1[:, None], b2[:, None], b3[:, None]        # (C, 1)

    x_flat = x_nchw.reshape(N, C, HW)                            # free reshape (no transpose)
    xcol = (jnp.arange(HW, dtype=jnp.int32) % W).reshape(1, HW)  # column index per pixel

    flops = int(N * 2 * HW * C * C * 11)                         # 1x1 + 3x3(=9x) + 1x1
    bytes_accessed = int(2 * N * C * HW * 4 + (11 * C * C + 3 * C + HW) * 4)

    out = pl.pallas_call(
        make_kernel(C, H, W, slope),
        out_shape=jax.ShapeDtypeStruct((N, C, HW), x_nchw.dtype),
        grid_spec=pltpu.PrefetchScalarGridSpec(
            num_scalar_prefetch=0,
            grid=(N,),
            in_specs=[
                pl.BlockSpec((1, HW), lambda n: (0, 0)),          # xcol
                pl.BlockSpec((1, C, HW), lambda n: (n, 0, 0)),    # x
                pl.BlockSpec((C, C), lambda n: (0, 0)),           # w1
                pl.BlockSpec((C, 1), lambda n: (0, 0)),           # b1
                pl.BlockSpec((9, C, C), lambda n: (0, 0, 0)),     # w2 (per-tap)
                pl.BlockSpec((C, 1), lambda n: (0, 0)),           # b2
                pl.BlockSpec((C, C), lambda n: (0, 0)),           # w3
                pl.BlockSpec((C, 1), lambda n: (0, 0)),           # b3
            ],
            out_specs=pl.BlockSpec((1, C, HW), lambda n: (n, 0, 0)),
        ),
        compiler_params=pltpu.CompilerParams(
            dimension_semantics=("parallel",),
            vmem_limit_bytes=64 * 1024 * 1024,
        ),
        cost_estimate=pl.CostEstimate(
            flops=flops, transcendentals=0, bytes_accessed=bytes_accessed),
    )(xcol, x_flat, w1k, b1k, w2k, b2k, w3k, b3k)

    return out.reshape(N, C, H, W)


def ref_forward_nchw(x, wc1, b1, wc2, b2, wc3, b3, slope=SLOPE):
    """Pure-JAX reference in PyTorch conventions (NCHW, OIHW weights)."""
    if slope < 1e-4:
        slope = 0.0

    def conv(v, w, b, pad):
        y = lax.conv_general_dilated(
            v, w, window_strides=(1, 1),
            padding=[(pad, pad), (pad, pad)],
            dimension_numbers=('NCHW', 'OIHW', 'NCHW'))
        return y + b[None, :, None, None]

    def lrelu(v):
        return jnp.where(v > 0, v, slope * v)

    out = lrelu(conv(x, wc1, b1, 0))
    out = lrelu(conv(out, wc2, b2, 1))
    out = conv(out, wc3, b3, 0)
    return x + out


if __name__ == "__main__":
    N, C, H, W = 2, 4, 16, 16
    key = jax.random.PRNGKey(0)
    kx_, k1, k2, k3, kb1, kb2, kb3 = jax.random.split(key, 7)

    x = jax.random.normal(kx_, (N, C, H, W), jnp.float32)

    # PyTorch-shaped (OIHW) weights, deterministic synthetic init.
    wc1 = jax.random.normal(k1, (C, C, 1, 1), jnp.float32) * 0.2
    wc2 = jax.random.normal(k2, (C, C, 3, 3), jnp.float32) * 0.1
    wc3 = jax.random.normal(k3, (C, C, 1, 1), jnp.float32) * 0.2
    b1 = jax.random.normal(kb1, (C,), jnp.float32) * 0.05
    b2 = jax.random.normal(kb2, (C,), jnp.float32) * 0.05
    b3 = jax.random.normal(kb3, (C,), jnp.float32) * 0.05

    y = res_bottleneck_block(x, wc1, b1, wc2, b2, wc3, b3)
    y = jax.block_until_ready(y)

    y_ref = jax.block_until_ready(ref_forward_nchw(x, wc1, b1, wc2, b2, wc3, b3))

    assert y.shape == (N, C, H, W)
    assert jnp.allclose(y, y_ref, rtol=1e-4, atol=1e-4), "mismatch vs reference"
    print("KERNEL_OK")
</pallas_src>

<mosaic_0001>
module attributes {stable_mosaic.version = 11 : i64} {
  func.func @kernel(%arg0: i32, %arg1: memref<1x256xi32, #tpu.memory_space<vmem>>, %arg2: memref<1x4x256xf32, #tpu.memory_space<vmem>>, %arg3: memref<4x4xf32, #tpu.memory_space<vmem>>, %arg4: memref<4x1xf32, #tpu.memory_space<vmem>>, %arg5: memref<9x4x4xf32, #tpu.memory_space<vmem>>, %arg6: memref<4x1xf32, #tpu.memory_space<vmem>>, %arg7: memref<4x4xf32, #tpu.memory_space<vmem>>, %arg8: memref<4x1xf32, #tpu.memory_space<vmem>>, %arg9: memref<1x4x256xf32, #tpu.memory_space<vmem>>) attributes {dimension_semantics = [#tpu.dimension_semantics<parallel>], iteration_bounds = array<i64: 2>, scalar_prefetch = 0 : i64, scratch_operands = 0 : i64, tpu.core_type = #tpu.core_type<tc>, window_params = [{pipeline_mode = #tpu.pipeline_mode<synchronous>, transform_indices = @transform_0, window_bounds = array<i64: 1, 256>}, {transform_indices = @transform_1, window_bounds = array<i64: 1, 4, 256>}, {pipeline_mode = #tpu.pipeline_mode<synchronous>, transform_indices = @transform_2, window_bounds = array<i64: 4, 4>}, {pipeline_mode = #tpu.pipeline_mode<synchronous>, transform_indices = @transform_3, window_bounds = array<i64: 4, 1>}, {pipeline_mode = #tpu.pipeline_mode<synchronous>, transform_indices = @transform_4, window_bounds = array<i64: 9, 4, 4>}, {pipeline_mode = #tpu.pipeline_mode<synchronous>, transform_indices = @transform_5, window_bounds = array<i64: 4, 1>}, {pipeline_mode = #tpu.pipeline_mode<synchronous>, transform_indices = @transform_6, window_bounds = array<i64: 4, 4>}, {pipeline_mode = #tpu.pipeline_mode<synchronous>, transform_indices = @transform_7, window_bounds = array<i64: 4, 1>}, {transform_indices = @transform_8, window_bounds = array<i64: 1, 4, 256>}]} {
    %c0 = arith.constant 0 : index
    %c0_0 = arith.constant 0 : index
    %0 = vector.load %arg3[%c0, %c0_0] : memref<4x4xf32, #tpu.memory_space<vmem>>, vector<4x4xf32>
    %c0_1 = arith.constant 0 : index
    %c0_2 = arith.constant 0 : index
    %c0_3 = arith.constant 0 : index
    %1 = vector.load %arg2[%c0_1, %c0_2, %c0_3] : memref<1x4x256xf32, #tpu.memory_space<vmem>>, vector<1x4x256xf32>
    %2 = vector.shape_cast %1 : vector<1x4x256xf32> to vector<4x256xf32>
    %cst = arith.constant dense<0.000000e+00> : vector<4x256xf32>
    %3 = tpu.matmul %0, %2, %cst {dimension_numbers = #tpu.dot_dimension_numbers<[1], [0], [0], [1], [0, 0, 1, 1], [], []>} : vector<4x4xf32>, vector<4x256xf32>, vector<4x256xf32> -> vector<4x256xf32>
    %c0_4 = arith.constant 0 : index
    %c0_5 = arith.constant 0 : index
    %4 = vector.load %arg4[%c0_4, %c0_5] : memref<4x1xf32, #tpu.memory_space<vmem>>, vector<4x1xf32>
    %5 = vector.broadcast %4 : vector<4x1xf32> to vector<4x256xf32>
    %6 = arith.addf %3, %5 : vector<4x256xf32>
    %cst_6 = arith.constant 0.000000e+00 : f32
    %7 = vector.broadcast %cst_6 : f32 to vector<4x256xf32>
    %8 = arith.cmpf ogt, %6, %7 : vector<4x256xf32>
    %cst_7 = arith.constant 0.00999999977 : f32
    %9 = vector.broadcast %cst_7 : f32 to vector<4x256xf32>
    %10 = arith.mulf %9, %6 : vector<4x256xf32>
    %11 = arith.select %8, %6, %10 : vector<4x256xi1>, vector<4x256xf32>
    %12 = tpu.iota {dimensions = array<i32: 1>} : vector<1x256xi32>
    %c0_8 = arith.constant 0 : index
    %c0_9 = arith.constant 0 : index
    %13 = vector.load %arg1[%c0_8, %c0_9] : memref<1x256xi32, #tpu.memory_space<vmem>>, vector<1x256xi32>
    %cst_10 = arith.constant 0.000000e+00 : f32
    %14 = vector.broadcast %cst_10 : f32 to vector<4x256xf32>
    %c17_i32 = arith.constant 17 : i32
    %15 = tpu.dynamic_rotate %11 by %c17_i32 dim 1 : vector<4x256xf32>, i32 -> vector<4x256xf32>
    %c16_i32 = arith.constant 16 : i32
    %16 = vector.broadcast %c16_i32 : i32 to vector<1x256xi32>
    %17 = arith.cmpi sge, %12, %16 : vector<1x256xi32>
    %c1_i32 = arith.constant 1 : i32
    %18 = vector.broadcast %c1_i32 : i32 to vector<1x256xi32>
    %19 = arith.cmpi sge, %13, %18 : vector<1x256xi32>
    %20 = arith.andi %17, %19 : vector<1x256xi1>
    %cst_11 = arith.constant 0.000000e+00 : f32
    %21 = vector.shape_cast %20 : vector<1x256xi1> to vector<1x256xi1>
    %22 = vector.broadcast %21 : vector<1x256xi1> to vector<4x256xi1>
    %23 = vector.broadcast %cst_11 : f32 to vector<4x256xf32>
    %24 = arith.select %22, %15, %23 : vector<4x256xi1>, vector<4x256xf32>
    %c0_12 = arith.constant 0 : index
    %c0_13 = arith.constant 0 : index
    %c0_14 = arith.constant 0 : index
    %25 = vector.load %arg5[%c0_12, %c0_13, %c0_14] : memref<9x4x4xf32, #tpu.memory_space<vmem>>, vector<1x4x4xf32>
    %26 = vector.shape_cast %25 : vector<1x4x4xf32> to vector<4x4xf32>
    %cst_15 = arith.constant dense<0.000000e+00> : vector<4x256xf32>
    %27 = tpu.matmul %26, %24, %cst_15 {dimension_numbers = #tpu.dot_dimension_numbers<[1], [0], [0], [1], [0, 0, 1, 1], [], []>} : vector<4x4xf32>, vector<4x256xf32>, vector<4x256xf32> -> vector<4x256xf32>
    %28 = arith.addf %14, %27 : vector<4x256xf32>
    %c16_i32_16 = arith.constant 16 : i32
    %29 = tpu.dynamic_rotate %11 by %c16_i32_16 dim 1 : vector<4x256xf32>, i32 -> vector<4x256xf32>
    %c16_i32_17 = arith.constant 16 : i32
    %30 = vector.broadcast %c16_i32_17 : i32 to vector<1x256xi32>
    %31 = arith.cmpi sge, %12, %30 : vector<1x256xi32>
    %cst_18 = arith.constant 0.000000e+00 : f32
    %32 = vector.shape_cast %31 : vector<1x256xi1> to vector<1x256xi1>
    %33 = vector.broadcast %32 : vector<1x256xi1> to vector<4x256xi1>
    %34 = vector.broadcast %cst_18 : f32 to vector<4x256xf32>
    %35 = arith.select %33, %29, %34 : vector<4x256xi1>, vector<4x256xf32>
    %c1 = arith.constant 1 : index
    %c0_19 = arith.constant 0 : index
    %c0_20 = arith.constant 0 : index
    %36 = vector.load %arg5[%c1, %c0_19, %c0_20] : memref<9x4x4xf32, #tpu.memory_space<vmem>>, vector<1x4x4xf32>
    %37 = vector.shape_cast %36 : vector<1x4x4xf32> to vector<4x4xf32>
    %cst_21 = arith.constant dense<0.000000e+00> : vector<4x256xf32>
    %38 = tpu.matmul %37, %35, %cst_21 {dimension_numbers = #tpu.dot_dimension_numbers<[1], [0], [0], [1], [0, 0, 1, 1], [], []>} : vector<4x4xf32>, vector<4x256xf32>, vector<4x256xf32> -> vector<4x256xf32>
    %39 = arith.addf %28, %38 : vector<4x256xf32>
    %c15_i32 = arith.constant 15 : i32
    %40 = tpu.dynamic_rotate %11 by %c15_i32 dim 1 : vector<4x256xf32>, i32 -> vector<4x256xf32>
    %c16_i32_22 = arith.constant 16 : i32
    %41 = vector.broadcast %c16_i32_22 : i32 to vector<1x256xi32>
    %42 = arith.cmpi sge, %12, %41 : vector<1x256xi32>
    %c14_i32 = arith.constant 14 : i32
    %43 = vector.broadcast %c14_i32 : i32 to vector<1x256xi32>
    %44 = arith.cmpi sle, %13, %43 : vector<1x256xi32>
    %45 = arith.andi %42, %44 : vector<1x256xi1>
    %cst_23 = arith.constant 0.000000e+00 : f32
    %46 = vector.shape_cast %45 : vector<1x256xi1> to vector<1x256xi1>
    %47 = vector.broadcast %46 : vector<1x256xi1> to vector<4x256xi1>
    %48 = vector.broadcast %cst_23 : f32 to vector<4x256xf32>
    %49 = arith.select %47, %40, %48 : vector<4x256xi1>, vector<4x256xf32>
    %c2 = arith.constant 2 : index
    %c0_24 = arith.constant 0 : index
    %c0_25 = arith.constant 0 : index
    %50 = vector.load %arg5[%c2, %c0_24, %c0_25] : memref<9x4x4xf32, #tpu.memory_space<vmem>>, vector<1x4x4xf32>
    %51 = vector.shape_cast %50 : vector<1x4x4xf32> to vector<4x4xf32>
    %cst_26 = arith.constant dense<0.000000e+00> : vector<4x256xf32>
    %52 = tpu.matmul %51, %49, %cst_26 {dimension_numbers = #tpu.dot_dimension_numbers<[1], [0], [0], [1], [0, 0, 1, 1], [], []>} : vector<4x4xf32>, vector<4x256xf32>, vector<4x256xf32> -> vector<4x256xf32>
    %53 = arith.addf %39, %52 : vector<4x256xf32>
    %c1_i32_27 = arith.constant 1 : i32
    %54 = tpu.dynamic_rotate %11 by %c1_i32_27 dim 1 : vector<4x256xf32>, i32 -> vector<4x256xf32>
    %c1_i32_28 = arith.constant 1 : i32
    %55 = vector.broadcast %c1_i32_28 : i32 to vector<1x256xi32>
    %56 = arith.cmpi sge, %13, %55 : vector<1x256xi32>
    %cst_29 = arith.constant 0.000000e+00 : f32
    %57 = vector.shape_cast %56 : vector<1x256xi1> to vector<1x256xi1>
    %58 = vector.broadcast %57 : vector<1x256xi1> to vector<4x256xi1>
    %59 = vector.broadcast %cst_29 : f32 to vector<4x256xf32>
    %60 = arith.select %58, %54, %59 : vector<4x256xi1>, vector<4x256xf32>
    %c3 = arith.constant 3 : index
    %c0_30 = arith.constant 0 : index
    %c0_31 = arith.constant 0 : index
    %61 = vector.load %arg5[%c3, %c0_30, %c0_31] : memref<9x4x4xf32, #tpu.memory_space<vmem>>, vector<1x4x4xf32>
    %62 = vector.shape_cast %61 : vector<1x4x4xf32> to vector<4x4xf32>
    %cst_32 = arith.constant dense<0.000000e+00> : vector<4x256xf32>
    %63 = tpu.matmul %62, %60, %cst_32 {dimension_numbers = #tpu.dot_dimension_numbers<[1], [0], [0], [1], [0, 0, 1, 1], [], []>} : vector<4x4xf32>, vector<4x256xf32>, vector<4x256xf32> -> vector<4x256xf32>
    %64 = arith.addf %53, %63 : vector<4x256xf32>
    %c4 = arith.constant 4 : index
    %c0_33 = arith.constant 0 : index
    %c0_34 = arith.constant 0 : index
    %65 = vector.load %arg5[%c4, %c0_33, %c0_34] : memref<9x4x4xf32, #tpu.memory_space<vmem>>, vector<1x4x4xf32>
    %66 = vector.shape_cast %65 : vector<1x4x4xf32> to vector<4x4xf32>
    %cst_35 = arith.constant dense<0.000000e+00> : vector<4x256xf32>
    %67 = tpu.matmul %66, %11, %cst_35 {dimension_numbers = #tpu.dot_dimension_numbers<[1], [0], [0], [1], [0, 0, 1, 1], [], []>} : vector<4x4xf32>, vector<4x256xf32>, vector<4x256xf32> -> vector<4x256xf32>
    %68 = arith.addf %64, %67 : vector<4x256xf32>
    %c255_i32 = arith.constant 255 : i32
    %69 = tpu.dynamic_rotate %11 by %c255_i32 dim 1 : vector<4x256xf32>, i32 -> vector<4x256xf32>
    %c14_i32_36 = arith.constant 14 : i32
    %70 = vector.broadcast %c14_i32_36 : i32 to vector<1x256xi32>
    %71 = arith.cmpi sle, %13, %70 : vector<1x256xi32>
    %cst_37 = arith.constant 0.000000e+00 : f32
    %72 = vector.shape_cast %71 : vector<1x256xi1> to vector<1x256xi1>
    %73 = vector.broadcast %72 : vector<1x256xi1> to vector<4x256xi1>
    %74 = vector.broadcast %cst_37 : f32 to vector<4x256xf32>
    %75 = arith.select %73, %69, %74 : vector<4x256xi1>, vector<4x256xf32>
    %c5 = arith.constant 5 : index
    %c0_38 = arith.constant 0 : index
    %c0_39 = arith.constant 0 : index
    %76 = vector.load %arg5[%c5, %c0_38, %c0_39] : memref<9x4x4xf32, #tpu.memory_space<vmem>>, vector<1x4x4xf32>
    %77 = vector.shape_cast %76 : vector<1x4x4xf32> to vector<4x4xf32>
    %cst_40 = arith.constant dense<0.000000e+00> : vector<4x256xf32>
    %78 = tpu.matmul %77, %75, %cst_40 {dimension_numbers = #tpu.dot_dimension_numbers<[1], [0], [0], [1], [0, 0, 1, 1], [], []>} : vector<4x4xf32>, vector<4x256xf32>, vector<4x256xf32> -> vector<4x256xf32>
    %79 = arith.addf %68, %78 : vector<4x256xf32>
    %c241_i32 = arith.constant 241 : i32
    %80 = tpu.dynamic_rotate %11 by %c241_i32 dim 1 : vector<4x256xf32>, i32 -> vector<4x256xf32>
    %c240_i32 = arith.constant 240 : i32
    %81 = vector.broadcast %c240_i32 : i32 to vector<1x256xi32>
    %82 = arith.cmpi slt, %12, %81 : vector<1x256xi32>
    %c1_i32_41 = arith.constant 1 : i32
    %83 = vector.broadcast %c1_i32_41 : i32 to vector<1x256xi32>
    %84 = arith.cmpi sge, %13, %83 : vector<1x256xi32>
    %85 = arith.andi %82, %84 : vector<1x256xi1>
    %cst_42 = arith.constant 0.000000e+00 : f32
    %86 = vector.shape_cast %85 : vector<1x256xi1> to vector<1x256xi1>
    %87 = vector.broadcast %86 : vector<1x256xi1> to vector<4x256xi1>
    %88 = vector.broadcast %cst_42 : f32 to vector<4x256xf32>
    %89 = arith.select %87, %80, %88 : vector<4x256xi1>, vector<4x256xf32>
    %c6 = arith.constant 6 : index
    %c0_43 = arith.constant 0 : index
    %c0_44 = arith.constant 0 : index
    %90 = vector.load %arg5[%c6, %c0_43, %c0_44] : memref<9x4x4xf32, #tpu.memory_space<vmem>>, vector<1x4x4xf32>
    %91 = vector.shape_cast %90 : vector<1x4x4xf32> to vector<4x4xf32>
    %cst_45 = arith.constant dense<0.000000e+00> : vector<4x256xf32>
    %92 = tpu.matmul %91, %89, %cst_45 {dimension_numbers = #tpu.dot_dimension_numbers<[1], [0], [0], [1], [0, 0, 1, 1], [], []>} : vector<4x4xf32>, vector<4x256xf32>, vector<4x256xf32> -> vector<4x256xf32>
    %93 = arith.addf %79, %92 : vector<4x256xf32>
    %c240_i32_46 = arith.constant 240 : i32
    %94 = tpu.dynamic_rotate %11 by %c240_i32_46 dim 1 : vector<4x256xf32>, i32 -> vector<4x256xf32>
    %c240_i32_47 = arith.constant 240 : i32
    %95 = vector.broadcast %c240_i32_47 : i32 to vector<1x256xi32>
    %96 = arith.cmpi slt, %12, %95 : vector<1x256xi32>
    %cst_48 = arith.constant 0.000000e+00 : f32
    %97 = vector.shape_cast %96 : vector<1x256xi1> to vector<1x256xi1>
    %98 = vector.broadcast %97 : vector<1x256xi1> to vector<4x256xi1>
    %99 = vector.broadcast %cst_48 : f32 to vector<4x256xf32>
    %100 = arith.select %98, %94, %99 : vector<4x256xi1>, vector<4x256xf32>
    %c7 = arith.constant 7 : index
    %c0_49 = arith.constant 0 : index
    %c0_50 = arith.constant 0 : index
    %101 = vector.load %arg5[%c7, %c0_49, %c0_50] : memref<9x4x4xf32, #tpu.memory_space<vmem>>, vector<1x4x4xf32>
    %102 = vector.shape_cast %101 : vector<1x4x4xf32> to vector<4x4xf32>
    %cst_51 = arith.constant dense<0.000000e+00> : vector<4x256xf32>
    %103 = tpu.matmul %102, %100, %cst_51 {dimension_numbers = #tpu.dot_dimension_numbers<[1], [0], [0], [1], [0, 0, 1, 1], [], []>} : vector<4x4xf32>, vector<4x256xf32>, vector<4x256xf32> -> vector<4x256xf32>
    %104 = arith.addf %93, %103 : vector<4x256xf32>
    %c239_i32 = arith.constant 239 : i32
    %105 = tpu.dynamic_rotate %11 by %c239_i32 dim 1 : vector<4x256xf32>, i32 -> vector<4x256xf32>
    %c240_i32_52 = arith.constant 240 : i32
    %106 = vector.broadcast %c240_i32_52 : i32 to vector<1x256xi32>
    %107 = arith.cmpi slt, %12, %106 : vector<1x256xi32>
    %c14_i32_53 = arith.constant 14 : i32
    %108 = vector.broadcast %c14_i32_53 : i32 to vector<1x256xi32>
    %109 = arith.cmpi sle, %13, %108 : vector<1x256xi32>
    %110 = arith.andi %107, %109 : vector<1x256xi1>
    %cst_54 = arith.constant 0.000000e+00 : f32
    %111 = vector.shape_cast %110 : vector<1x256xi1> to vector<1x256xi1>
    %112 = vector.broadcast %111 : vector<1x256xi1> to vector<4x256xi1>
    %113 = vector.broadcast %cst_54 : f32 to vector<4x256xf32>
    %114 = arith.select %112, %105, %113 : vector<4x256xi1>, vector<4x256xf32>
    %c8 = arith.constant 8 : index
    %c0_55 = arith.constant 0 : index
    %c0_56 = arith.constant 0 : index
    %115 = vector.load %arg5[%c8, %c0_55, %c0_56] : memref<9x4x4xf32, #tpu.memory_space<vmem>>, vector<1x4x4xf32>
    %116 = vector.shape_cast %115 : vector<1x4x4xf32> to vector<4x4xf32>
    %cst_57 = arith.constant dense<0.000000e+00> : vector<4x256xf32>
    %117 = tpu.matmul %116, %114, %cst_57 {dimension_numbers = #tpu.dot_dimension_numbers<[1], [0], [0], [1], [0, 0, 1, 1], [], []>} : vector<4x4xf32>, vector<4x256xf32>, vector<4x256xf32> -> vector<4x256xf32>
    %118 = arith.addf %104, %117 : vector<4x256xf32>
    %c0_58 = arith.constant 0 : index
    %c0_59 = arith.constant 0 : index
    %119 = vector.load %arg6[%c0_58, %c0_59] : memref<4x1xf32, #tpu.memory_space<vmem>>, vector<4x1xf32>
    %120 = vector.broadcast %119 : vector<4x1xf32> to vector<4x256xf32>
    %121 = arith.addf %118, %120 : vector<4x256xf32>
    %cst_60 = arith.constant 0.000000e+00 : f32
    %122 = vector.broadcast %cst_60 : f32 to vector<4x256xf32>
    %123 = arith.cmpf ogt, %121, %122 : vector<4x256xf32>
    %cst_61 = arith.constant 0.00999999977 : f32
    %124 = vector.broadcast %cst_61 : f32 to vector<4x256xf32>
    %125 = arith.mulf %124, %121 : vector<4x256xf32>
    %126 = arith.select %123, %121, %125 : vector<4x256xi1>, vector<4x256xf32>
    %c0_62 = arith.constant 0 : index
    %c0_63 = arith.constant 0 : index
    %127 = vector.load %arg7[%c0_62, %c0_63] : memref<4x4xf32, #tpu.memory_space<vmem>>, vector<4x4xf32>
    %cst_64 = arith.constant dense<0.000000e+00> : vector<4x256xf32>
    %128 = tpu.matmul %127, %126, %cst_64 {dimension_numbers = #tpu.dot_dimension_numbers<[1], [0], [0], [1], [0, 0, 1, 1], [], []>} : vector<4x4xf32>, vector<4x256xf32>, vector<4x256xf32> -> vector<4x256xf32>
    %c0_65 = arith.constant 0 : index
    %c0_66 = arith.constant 0 : index
    %129 = vector.load %arg8[%c0_65, %c0_66] : memref<4x1xf32, #tpu.memory_space<vmem>>, vector<4x1xf32>
    %130 = vector.broadcast %129 : vector<4x1xf32> to vector<4x256xf32>
    %131 = arith.addf %128, %130 : vector<4x256xf32>
    %c0_67 = arith.constant 0 : index
    %c0_68 = arith.constant 0 : index
    %c0_69 = arith.constant 0 : index
    %132 = vector.load %arg2[%c0_67, %c0_68, %c0_69] : memref<1x4x256xf32, #tpu.memory_space<vmem>>, vector<1x4x256xf32>
    %133 = vector.shape_cast %132 : vector<1x4x256xf32> to vector<4x256xf32>
    %134 = arith.addf %133, %131 : vector<4x256xf32>
    %c0_70 = arith.constant 0 : index
    %c0_71 = arith.constant 0 : index
    %c0_72 = arith.constant 0 : index
    %135 = vector.load %arg9[%c0_70, %c0_71, %c0_72] : memref<1x4x256xf32, #tpu.memory_space<vmem>>, vector<1x4x256xf32>
    %136 = vector.shape_cast %135 : vector<1x4x256xf32> to vector<4x256xf32>
    %137 = vector.shape_cast %134 : vector<4x256xf32> to vector<1x4x256xf32>
    tpu.vector_store %arg9[%c0_70, %c0_71, %c0_72], %137 {strides = array<i32>} : memref<1x4x256xf32, #tpu.memory_space<vmem>>, vector<1x4x256xf32>,
    return
  }
  func.func @transform_0(%arg0: i32) -> (i32, i32) {
    %c0_i32 = arith.constant 0 : i32
    %c0_i32_0 = arith.constant 0 : i32
    %c0_i32_1 = arith.constant 0 : i32
    return %c0_i32, %c0_i32_0 : i32, i32
  }
  func.func @transform_1(%arg0: i32) -> (i32, i32, i32) {
    %c0_i32 = arith.constant 0 : i32
    %c0_i32_0 = arith.constant 0 : i32
    %c0_i32_1 = arith.constant 0 : i32
    return %arg0, %c0_i32, %c0_i32_0 : i32, i32, i32
  }
  func.func @transform_2(%arg0: i32) -> (i32, i32) {
    %c0_i32 = arith.constant 0 : i32
    %c0_i32_0 = arith.constant 0 : i32
    %c0_i32_1 = arith.constant 0 : i32
    return %c0_i32, %c0_i32_0 : i32, i32
  }
  func.func @transform_3(%arg0: i32) -> (i32, i32) {
    %c0_i32 = arith.constant 0 : i32
    %c0_i32_0 = arith.constant 0 : i32
    %c0_i32_1 = arith.constant 0 : i32
    return %c0_i32, %c0_i32_0 : i32, i32
  }
  func.func @transform_4(%arg0: i32) -> (i32, i32, i32) {
    %c0_i32 = arith.constant 0 : i32
    %c0_i32_0 = arith.constant 0 : i32
    %c0_i32_1 = arith.constant 0 : i32
    %c0_i32_2 = arith.constant 0 : i32
    return %c0_i32, %c0_i32_0, %c0_i32_1 : i32, i32, i32
  }
  func.func @transform_5(%arg0: i32) -> (i32, i32) {
    %c0_i32 = arith.constant 0 : i32
    %c0_i32_0 = arith.constant 0 : i32
    %c0_i32_1 = arith.constant 0 : i32
    return %c0_i32, %c0_i32_0 : i32, i32
  }
  func.func @transform_6(%arg0: i32) -> (i32, i32) {
    %c0_i32 = arith.constant 0 : i32
    %c0_i32_0 = arith.constant 0 : i32
    %c0_i32_1 = arith.constant 0 : i32
    return %c0_i32, %c0_i32_0 : i32, i32
  }
  func.func @transform_7(%arg0: i32) -> (i32, i32) {
    %c0_i32 = arith.constant 0 : i32
    %c0_i32_0 = arith.constant 0 : i32
    %c0_i32_1 = arith.constant 0 : i32
    return %c0_i32, %c0_i32_0 : i32, i32
  }
  func.func @transform_8(%arg0: i32) -> (i32, i32, i32) {
    %c0_i32 = arith.constant 0 : i32
    %c0_i32_0 = arith.constant 0 : i32
    %c0_i32_1 = arith.constant 0 : i32
    return %arg0, %c0_i32, %c0_i32_0 : i32, i32, i32
  }
}

</mosaic_0001>

<llo_original>
// kernel: tpu_custom_call.1
$region0: #{tpu_custom_call.1}
  #allocation0 [shape = 'u32[]', space=smem, size = 0x4, offset = 0x4, fixed_abs, tag = 'smem constant byte address 0x4 - core index']
  #allocation1 [shape = 'u32[144,128]{1,0:T(1,128)}', space=vmem, size = 0x12000, scoped, tag = 'internal scratch']
  %s0 = inlined_call_operand.vmem [shape: s32[1,256], index: 0, kind: input, shape index: {}]
  %s1 = inlined_call_operand.vmem [shape: f32[2,4,256], index: 1, kind: input, shape index: {}]
  %s2 = inlined_call_operand.vmem [shape: f32[4,4], index: 2, kind: input, shape index: {}]
  %s3 = inlined_call_operand.vmem [shape: f32[4,1], index: 3, kind: input, shape index: {}]
  %s4 = inlined_call_operand.vmem [shape: f32[9,4,4], index: 4, kind: input, shape index: {}]
  %s5 = inlined_call_operand.vmem [shape: f32[4,1], index: 5, kind: input, shape index: {}]
  %s6 = inlined_call_operand.vmem [shape: f32[4,4], index: 6, kind: input, shape index: {}]
  %s7 = inlined_call_operand.vmem [shape: f32[4,1], index: 7, kind: input, shape index: {}]
  %s8 = inlined_call_operand.hbm [shape: f32[2,4,256], index: 8, kind: output, shape index: {}]
  %s9 = sld [smem:[#allocation0]]
  $region65: #{tpu_custom_call.1} parent=0
    _
  %s11 = ssub.s32 1, %s9
  %s12 = scalar_select 0, %s11, %s9
  $region1: #{tpu_custom_call.1} parent=0
    #allocation2 [shape = 'u8[8192]{0}', space=vmem, size = 0x2000, scoped, tag = 'output window, operand 0']
    #allocation3 [shape = 's32[2]{0}', space=sflag, size = 0x8, scoped, tag = 'scoped memory for tpu_custom_call.1']
    %13 = vsyncpa [#allocation3], 0
    %s14 = scalar_lea.sflag [#allocation3], 1
    %15 = vsyncpa %s14, 0
    loop: start=0, step=1, limit=4
    $region2: #{tpu_custom_call.1} parent=1 // loop_pre_header
      _
    $region3: #{tpu_custom_call.1} parent=1 // loop_header
      %s17 = sphi 0, %s21
      %p18 = scmp.ge.s32.totalorder %s17, 4
      %s25 = sphi 0, %s25
      %s27 = sphi 0, %s25
      %s28 = sphi 0, %s27
      %s42 = sphi 0, %s28
      %s48 = sphi 0, %s50
      %s51 = sphi 0, %s48
      %s52 = sphi 0, %s51
      %s68 = sphi 0, %s52
      %s72 = sphi 0, %s72
      %s74 = sphi 0, %s72
      %s75 = sphi 0, %s74
      %s89 = sphi 0, %s75
      %s93 = sphi 0, %s93
      %s95 = sphi 0, %s93
      %s96 = sphi 0, %s95
      %s110 = sphi 0, %s96
      %s114 = sphi 0, %s114
      %s116 = sphi 0, %s114
      %s117 = sphi 0, %s116
      %s131 = sphi 0, %s117
      %s135 = sphi 0, %s135
      %s137 = sphi 0, %s135
      %s138 = sphi 0, %s137
      %s152 = sphi 0, %s138
      %s156 = sphi 0, %s156
      %s158 = sphi 0, %s156
      %s159 = sphi 0, %s158
      %s173 = sphi 0, %s159
      %s177 = sphi 0, %s177
      %s179 = sphi 0, %s177
      %s180 = sphi 0, %s179
      %s194 = sphi 0, %s180
      %s200 = sphi 0, %s202
      %s203 = sphi 0, %s200
      %s204 = sphi 0, %s203
      %s220 = sphi 0, %s204
    $region4: #{tpu_custom_call.1} parent=1 // loop_header_branch
      %20 = sbr.rel (%p18) target = $region8
    $region5: #{tpu_custom_call.1} parent=1 // loop_body
      %s22 = ssub.s32 %s17, 1
      %s23 = ssub.s32 %s17, 2
      %s24 = sadd.s32 %s17, 1
      %s26 = sadd.s32 %s25, 1
      %p29 = scmp.eq.s32.totalorder %s17, 1
      %p30 = scmp.ne.s32.totalorder %s25, %s27
      %p31 = scmp.eq.s32.totalorder %s17, 0
      %p32 = por %p30, %p31
      %p33 = scmp.ne.s32.totalorder %s25, %s27
      %p34 = scmp.eq.s32.totalorder %s22, 1
      %p35 = por %p33, %p34
      %p36 = scmp.ne.s32.totalorder %s27, %s28
      %p37 = scmp.eq.s32.totalorder %s22, 0
      %p38 = por %p36, %p37
      %p39 = scmp.ne.s32.totalorder %s27, %s28
      %p40 = scmp.eq.s32.totalorder %s23, 1
      %p41 = por %p39, %p40
      %p43 = scmp.ne.s32.totalorder %s28, %s42
      %p44 = scmp.eq.s32.totalorder %s23, 0
      %p45 = por %p43, %p44
      %s46 = ssub.s32 %s17, %s24
      %p47 = scmp.eq.s32.totalorder %s46, 0
      %s49 = sadd.s32 %s48, 1
      %s50 = scalar_select %p47, %s48, %s49
      %p53 = pneg %p47
      %p54 = scmp.eq.s32.totalorder %s17, 1
      %p55 = por %p53, %p54
      %p56 = scmp.ne.s32.totalorder %s48, %s51
      %p57 = scmp.eq.s32.totalorder %s17, 0
      %p58 = por %p56, %p57
      %p59 = scmp.ne.s32.totalorder %s48, %s51
      %p60 = scmp.eq.s32.totalorder %s22, 1
      %p61 = por %p59, %p60
      %p62 = scmp.ne.s32.totalorder %s51, %s52
      %p63 = scmp.eq.s32.totalorder %s22, 0
      %p64 = por %p62, %p63
      %p65 = scmp.ne.s32.totalorder %s51, %s52
      %p66 = scmp.eq.s32.totalorder %s23, 1
      %p67 = por %p65, %p66
      %p69 = scmp.ne.s32.totalorder %s52, %s68
      %p70 = scmp.eq.s32.totalorder %s23, 0
      %p71 = por %p69, %p70
      %s73 = sadd.s32 %s72, 1
      %p76 = scmp.eq.s32.totalorder %s17, 1
      %p77 = scmp.ne.s32.totalorder %s72, %s74
      %p78 = scmp.eq.s32.totalorder %s17, 0
      %p79 = por %p77, %p78
      %p80 = scmp.ne.s32.totalorder %s72, %s74
      %p81 = scmp.eq.s32.totalorder %s22, 1
      %p82 = por %p80, %p81
      %p83 = scmp.ne.s32.totalorder %s74, %s75
      %p84 = scmp.eq.s32.totalorder %s22, 0
      %p85 = por %p83, %p84
      %p86 = scmp.ne.s32.totalorder %s74, %s75
      %p87 = scmp.eq.s32.totalorder %s23, 1
      %p88 = por %p86, %p87
      %p90 = scmp.ne.s32.totalorder %s75, %s89
      %p91 = scmp.eq.s32.totalorder %s23, 0
      %p92 = por %p90, %p91
      %s94 = sadd.s32 %s93, 1
      %p97 = scmp.eq.s32.totalorder %s17, 1
      %p98 = scmp.ne.s32.totalorder %s93, %s95
      %p99 = scmp.eq.s32.totalorder %s17, 0
      %p100 = por %p98, %p99
      %p101 = scmp.ne.s32.totalorder %s93, %s95
      %p102 = scmp.eq.s32.totalorder %s22, 1
      %p103 = por %p101, %p102
      %p104 = scmp.ne.s32.totalorder %s95, %s96
      %p105 = scmp.eq.s32.totalorder %s22, 0
      %p106 = por %p104, %p105
      %p107 = scmp.ne.s32.totalorder %s95, %s96
      %p108 = scmp.eq.s32.totalorder %s23, 1
      %p109 = por %p107, %p108
      %p111 = scmp.ne.s32.totalorder %s96, %s110
      %p112 = scmp.eq.s32.totalorder %s23, 0
      %p113 = por %p111, %p112
      %s115 = sadd.s32 %s114, 1
      %p118 = scmp.eq.s32.totalorder %s17, 1
      %p119 = scmp.ne.s32.totalorder %s114, %s116
      %p120 = scmp.eq.s32.totalorder %s17, 0
      %p121 = por %p119, %p120
      %p122 = scmp.ne.s32.totalorder %s114, %s116
      %p123 = scmp.eq.s32.totalorder %s22, 1
      %p124 = por %p122, %p123
      %p125 = scmp.ne.s32.totalorder %s116, %s117
      %p126 = scmp.eq.s32.totalorder %s22, 0
      %p127 = por %p125, %p126
      %p128 = scmp.ne.s32.totalorder %s116, %s117
      %p129 = scmp.eq.s32.totalorder %s23, 1
      %p130 = por %p128, %p129
      %p132 = scmp.ne.s32.totalorder %s117, %s131
      %p133 = scmp.eq.s32.totalorder %s23, 0
      %p134 = por %p132, %p133
      %s136 = sadd.s32 %s135, 1
      %p139 = scmp.eq.s32.totalorder %s17, 1
      %p140 = scmp.ne.s32.totalorder %s135, %s137
      %p141 = scmp.eq.s32.totalorder %s17, 0
      %p142 = por %p140, %p141
      %p143 = scmp.ne.s32.totalorder %s135, %s137
      %p144 = scmp.eq.s32.totalorder %s22, 1
      %p145 = por %p143, %p144
      %p146 = scmp.ne.s32.totalorder %s137, %s138
      %p147 = scmp.eq.s32.totalorder %s22, 0
      %p148 = por %p146, %p147
      %p149 = scmp.ne.s32.totalorder %s137, %s138
      %p150 = scmp.eq.s32.totalorder %s23, 1
      %p151 = por %p149, %p150
      %p153 = scmp.ne.s32.totalorder %s138, %s152
      %p154 = scmp.eq.s32.totalorder %s23, 0
      %p155 = por %p153, %p154
      %s157 = sadd.s32 %s156, 1
      %p160 = scmp.eq.s32.totalorder %s17, 1
      %p161 = scmp.ne.s32.totalorder %s156, %s158
      %p162 = scmp.eq.s32.totalorder %s17, 0
      %p163 = por %p161, %p162
      %p164 = scmp.ne.s32.totalorder %s156, %s158
      %p165 = scmp.eq.s32.totalorder %s22, 1
      %p166 = por %p164, %p165
      %p167 = scmp.ne.s32.totalorder %s158, %s159
      %p168 = scmp.eq.s32.totalorder %s22, 0
      %p169 = por %p167, %p168
      %p170 = scmp.ne.s32.totalorder %s158, %s159
      %p171 = scmp.eq.s32.totalorder %s23, 1
      %p172 = por %p170, %p171
      %p174 = scmp.ne.s32.totalorder %s159, %s173
      %p175 = scmp.eq.s32.totalorder %s23, 0
      %p176 = por %p174, %p175
      %s178 = sadd.s32 %s177, 1
      %p181 = scmp.eq.s32.totalorder %s17, 1
      %p182 = scmp.ne.s32.totalorder %s177, %s179
      %p183 = scmp.eq.s32.totalorder %s17, 0
      %p184 = por %p182, %p183
      %p185 = scmp.ne.s32.totalorder %s177, %s179
      %p186 = scmp.eq.s32.totalorder %s22, 1
      %p187 = por %p185, %p186
      %p188 = scmp.ne.s32.totalorder %s179, %s180
      %p189 = scmp.eq.s32.totalorder %s22, 0
      %p190 = por %p188, %p189
      %p191 = scmp.ne.s32.totalorder %s179, %s180
      %p192 = scmp.eq.s32.totalorder %s23, 1
      %p193 = por %p191, %p192
      %p195 = scmp.ne.s32.totalorder %s180, %s194
      %p196 = scmp.eq.s32.totalorder %s23, 0
      %p197 = por %p195, %p196
      %s198 = ssub.s32 %s17, %s24
      %p199 = scmp.eq.s32.totalorder %s198, 0
      %s201 = sadd.s32 %s200, 1
      %s202 = scalar_select %p199, %s200, %s201
      %p205 = pneg %p199
      %p206 = scmp.eq.s32.totalorder %s17, 1
      %p207 = por %p205, %p206
      %p208 = scmp.ne.s32.totalorder %s200, %s203
      %p209 = scmp.eq.s32.totalorder %s17, 0
      %p210 = por %p208, %p209
      %p211 = scmp.ne.s32.totalorder %s200, %s203
      %p212 = scmp.eq.s32.totalorder %s22, 1
      %p213 = por %p211, %p212
      %p214 = scmp.ne.s32.totalorder %s203, %s204
      %p215 = scmp.eq.s32.totalorder %s22, 0
      %p216 = por %p214, %p215
      %p217 = scmp.ne.s32.totalorder %s203, %s204
      %p218 = scmp.eq.s32.totalorder %s23, 1
      %p219 = por %p217, %p218
      %p221 = scmp.ne.s32.totalorder %s204, %s220
      %p222 = scmp.eq.s32.totalorder %s23, 0
      %p223 = por %p221, %p222
      %p224 = scmp.le.s32.totalorder 1, %s17
      %p225 = scmp.lt.s32.totalorder %s17, 3
      %p226 = pnand %p224, %p225
      %p227 = pneg %p226
      // Predicated region
      $region9: #{tpu_custom_call.1} parent=5 // pred_check
        _
      $region10: #{tpu_custom_call.1} parent=5 // pred_check_branch
        %229 = sbr.rel (%p226) target = $region12
      $region11: #{tpu_custom_call.1} parent=5 // pred_region
        %s230 = ssub.s32 %s17, 1
        // Predicated region
        $region13: #{tpu_custom_call.1} parent=11 // pred_check
          %p231 = pneg %p38
        $region14: #{tpu_custom_call.1} parent=11 // pred_check_branch
          %233 = sbr.rel (%p231) target = $region16
        $region15: #{tpu_custom_call.1} parent=11 // pred_region
          _
        $region16: #{tpu_custom_call.1} parent=11 // pred_fallthru
          _
        // Predicated region
        $region17: #{tpu_custom_call.1} parent=11 // pred_check
          %p234 = pneg %p85
        $region18: #{tpu_custom_call.1} parent=11 // pred_check_branch
          %236 = sbr.rel (%p234) target = $region20
        $region19: #{tpu_custom_call.1} parent=11 // pred_region
          _
        $region20: #{tpu_custom_call.1} parent=11 // pred_fallthru
          _
        // Predicated region
        $region21: #{tpu_custom_call.1} parent=11 // pred_check
          %p237 = pneg %p106
        $region22: #{tpu_custom_call.1} parent=11 // pred_check_branch
          %239 = sbr.rel (%p237) target = $region24
        $region23: #{tpu_custom_call.1} parent=11 // pred_region
          _
        $region24: #{tpu_custom_call.1} parent=11 // pred_fallthru
          _
        // Predicated region
        $region25: #{tpu_custom_call.1} parent=11 // pred_check
          %p240 = pneg %p127
        $region26: #{tpu_custom_call.1} parent=11 // pred_check_branch
          %242 = sbr.rel (%p240) target = $region28
        $region27: #{tpu_custom_call.1} parent=11 // pred_region
          _
        $region28: #{tpu_custom_call.1} parent=11 // pred_fallthru
          _
        // Predicated region
        $region29: #{tpu_custom_call.1} parent=11 // pred_check
          %p243 = pneg %p148
        $region30: #{tpu_custom_call.1} parent=11 // pred_check_branch
          %245 = sbr.rel (%p243) target = $region32
        $region31: #{tpu_custom_call.1} parent=11 // pred_region
          _
        $region32: #{tpu_custom_call.1} parent=11 // pred_fallthru
          _
        // Predicated region
        $region33: #{tpu_custom_call.1} parent=11 // pred_check
          %p246 = pneg %p169
        $region34: #{tpu_custom_call.1} parent=11 // pred_check_branch
          %248 = sbr.rel (%p246) target = $region36
        $region35: #{tpu_custom_call.1} parent=11 // pred_region
          _
        $region36: #{tpu_custom_call.1} parent=11 // pred_fallthru
          _
        // Predicated region
        $region37: #{tpu_custom_call.1} parent=11 // pred_check
          %p249 = pneg %p190
        $region38: #{tpu_custom_call.1} parent=11 // pred_check_branch
          %251 = sbr.rel (%p249) target = $region40
        $region39: #{tpu_custom_call.1} parent=11 // pred_region
          _
        $region40: #{tpu_custom_call.1} parent=11 // pred_fallthru
          _
      $region12: #{tpu_custom_call.1} parent=5 // pred_fallthru
        _
      %p252 = scmp.lt.s32.totalorder %s17, 2
      // Predicated region
      $region41: #{tpu_custom_call.1} parent=5 // pred_check
        %p253 = pneg %p252
      $region42: #{tpu_custom_call.1} parent=5 // pred_check_branch
        %255 = sbr.rel (%p253) target = $region44
      $region43: #{tpu_custom_call.1} parent=5 // pred_region
        // Predicated region
        $region45: #{tpu_custom_call.1} parent=43 // pred_check
          %p256 = pneg %p58
        $region46: #{tpu_custom_call.1} parent=43 // pred_check_branch
          %258 = sbr.rel (%p256) target = $region48
        $region47: #{tpu_custom_call.1} parent=43 // pred_region
          %p259 = scmp.lt.s32.totalorder %s17, 1
          %s260 = scalar_select %p259, %s17, 1
          %s261 = smul.addr %s260, 2
          %s262 = smul.addr %s261, 4
          %s263 = scalar_lea.vmem %s1, %s262
        $region48: #{tpu_custom_call.1} parent=43 // pred_fallthru
          _
      $region44: #{tpu_custom_call.1} parent=5 // pred_fallthru
        _
      %p264 = scmp.le.s32.totalorder 1, %s17
      %p265 = scmp.lt.s32.totalorder %s17, 3
      %p266 = pnand %p264, %p265
      %p267 = pneg %p266
      // Predicated region
      $region49: #{tpu_custom_call.1} parent=5 // pred_check
        _
      $region50: #{tpu_custom_call.1} parent=5 // pred_check_branch
        %269 = sbr.rel (%p266) target = $region52
      $region51: #{tpu_custom_call.1} parent=5 // pred_region
        %s270 = ssub.s32 %s17, 1
        %p271 = pneg %p38
        %p272 = pneg %p35
        %p273 = scmp.lt.s32.totalorder %s22, 1
        %s274 = scalar_select %p273, %s22, 1
        %s275 = smul.addr %s274, 2
        %s276 = smul.addr %s275, 4
        %s277 = scalar_lea.vmem %s1, %s276
        %p278 = pneg %p64
        %p279 = pneg %p61
        %p280 = pneg %p85
        %p281 = pneg %p82
        %p282 = pneg %p106
        %p283 = pneg %p103
        %p284 = pneg %p127
        %p285 = pneg %p124
        %p286 = pneg %p148
        %p287 = pneg %p145
        %p288 = pneg %p169
        %p289 = pneg %p166
        %p290 = pneg %p190
        %p291 = pneg %p187
        %p292 = pneg %p216
        %p293 = pneg %p213
        %s294 = sand.u32 %s203, 1
        %s295 = scalar_lea.sflag [#allocation3], %s294
        %s296 = sand.u32 %s203, 1
        %s297 = smul.addr %s296, 8
        %s298 = scalar_lea.vmem [#allocation2], %s297
        %p299 = scmp.lt.s32.totalorder %s22, 1
        %s300 = scalar_select %p299, %s22, 1
        %s301 = smul.addr %s300, 2
        %s302 = smul.addr %s301, 4
        %s303 = scalar_lea.vmem %s1, %s302
        %v304 = vld [vmem:[%s2] sm:$0xf]
        %v305 = vld [vmem:[%s303] sm:$0xff]
        %v306 = vld [vmem:[%s3] sm:$0xf]
        %308 = vset.pattern.permute.xlu0 0
        %309 = vperm.xlu0 %308, %v306
        %v310 = vpop.permute.xlu0 %309
        %v313 = vcombine.high %v305, %v305
        %vm314 = vcmask 31744
        %v316 = vsel %vm314, %v304, 0
        %vm318 = vcmask 1043456
        %v319 = vsel %vm318, %v305, 0
        %v321 = vsel %vm318, %v313, 0
        %323 = vmatprep.subr.mxu0 0.0
        %324 = vmatpush1.msra.mxu0 0.0
        %325 = vmatprep.subr.mxu0 0.0
        %326 = vmatpush1.msra.mxu0 0.0
        %327 = vmatprep.subr.mxu0 0.0
        %328 = vmatpush1.msra.mxu0 0.0
        %329 = vmatprep.subr.mxu0 0.0
        %330 = vmatpush1.msra.mxu0 0.0
        %331 = vmatprep.subr.mxu0 0.0
        %332 = vmatpush1.msra.mxu0 0.0
        %333 = vmatprep.subr.mxu0 0.0
        %334 = vmatpush1.msra.mxu0 0.0
        %335 = vmatprep.subr.mxu0 0.0
        %336 = vmatpush1.msra.mxu0 0.0
        %337 = vmatprep.subr.mxu0 0.0
        %338 = vmatpush1.msra.mxu0 0.0
        %339 = vmatprep.subr.mxu0 0.0
        %340 = vmatpush1.msra.mxu0 0.0
        %341 = vmatprep.subr.mxu0 0.0
        %342 = vmatpush1.msra.mxu0 0.0
        %343 = vmatprep.subr.mxu0 0.0
        %344 = vmatpush1.msra.mxu0 0.0
        %345 = vmatprep.subr.mxu0 0.0
        %346 = vmatpush1.msra.mxu0 0.0
        %347 = vmatprep.subr.mxu0 0.0
        %348 = vmatpush1.msra.mxu0 0.0
        %349 = vmatprep.subr.mxu0 0.0
        %350 = vmatpush1.msra.mxu0 0.0
        %351 = vmatprep.subr.mxu0 0.0
        %352 = vmatpush1.msra.mxu0 0.0
        %353 = vmatprep.subr.mxu0 %v321
        %354 = vmatpush1.msra.mxu0 %v319
        %355 = vmatprep.subr.mxu0 0.0
        %356 = vmatpush2.msra.mxu0 0.0
        %357 = vmatprep.subr.mxu0 0.0
        %358 = vmatpush2.msra.mxu0 0.0
        %359 = vmatprep.subr.mxu0 0.0
        %360 = vmatpush2.msra.mxu0 0.0
        %361 = vmatprep.subr.mxu0 0.0
        %362 = vmatpush2.msra.mxu0 0.0
        %363 = vmatprep.subr.mxu0 0.0
        %364 = vmatpush2.msra.mxu0 0.0
        %365 = vmatprep.subr.mxu0 0.0
        %366 = vmatpush2.msra.mxu0 0.0
        %367 = vmatprep.subr.mxu0 0.0
        %368 = vmatpush2.msra.mxu0 0.0
        %369 = vmatprep.subr.mxu0 0.0
        %370 = vmatpush2.msra.mxu0 0.0
        %371 = vmatprep.subr.mxu0 0.0
        %372 = vmatpush2.msra.mxu0 0.0
        %373 = vmatprep.subr.mxu0 0.0
        %374 = vmatpush2.msra.mxu0 0.0
        %375 = vmatprep.subr.mxu0 0.0
        %376 = vmatpush2.msra.mxu0 0.0
        %377 = vmatprep.subr.mxu0 0.0
        %378 = vmatpush2.msra.mxu0 0.0
        %379 = vmatprep.subr.mxu0 0.0
        %380 = vmatpush2.msra.mxu0 0.0
        %381 = vmatprep.subr.mxu0 0.0
        %382 = vmatpush2.msra.mxu0 0.0
        %383 = vmatprep.subr.mxu0 0.0
        %384 = vmatpush2.msra.mxu0 0.0
        %385 = vmatprep.subr.mxu0 0.0
        %386 = vmatpush2.msra.mxu0 0.0
        %387 = vmatprep.mubr.f32.mxu0 0.0
        %388 = vmatmul.mubr.f32.gmra.mxu0 %v316
        %v389 = vpop.f32.mrf.mxu0
        %v390 = vadd.f32 %v310, %v389
        %v391 = vpop.f32.mrf.mxu0
        %v392 = vadd.f32 %v310, %v391
        %393 = vdwg.mxu0
        %vm394 = vcmp.gt.f32.partialorder %v390, 0.0
        %vm395 = vcmp.gt.f32.partialorder %v392, 0.0
        %v396 = vmul.f32 %v390, 0.01
        %v397 = vmul.f32 %v392, 0.01
        %v398 = vsel %vm394, %v390, %v396
        %v399 = vsel %vm395, %v392, %v397
        %v400 = vlaneseq
        %v401 = vand.u32 %v400, 127
        %v402 = vadd.s32 %v401, 128
        %v403 = vld [vmem:[%s0] sm:$0x3]
        %404 = vrot.lane.b32.xlu0 %v398, 17
        %v405 = vpop.permute.xlu0 %404
        %406 = vrot.lane.b32.xlu0 %v399, 17
        %v407 = vpop.permute.xlu0 %406
        %vm408 = vcmp.lt.s32.totalorder %v401, 17
        %v409 = vsel %vm408, %v405, %v407
        %v410 = vsel %vm408, %v407, %v405
        %vm411 = vcmp.ge.s32.totalorder %v401, 16
        %vm412 = vcmp.ge.s32.totalorder %v402, 16
        %vm413 = vcmp.ge.s32.totalorder %v403, 1
        %v414 = vsel %vm413, 1, 0
        %v415 = vlaneseq
        %v416 = vshrl.u32 %v415, 7
        %v417 = vsub.s32 0, %v416
        %v418 = vrot.slane %v414, %v417
        %v419 = vlaneseq
        %v420 = vshrl.u32 %v419, 7
        %v421 = vsub.s32 1, %v420
        %v422 = vrot.slane %v414, %v421
        %vm423 = vcmp.ne.s32.totalorder %v418, 0
        %vm424 = vcmp.ne.s32.totalorder %v422, 0
        %vm425 = vmand %vm411, %vm423
        %vm426 = vmand %vm412, %vm424
        %v427 = vsel %vm425, 1, 0
        %v428 = vsel %vm426, 1, 0
        %v429 = vlaneseq
        %v430 = vshrl.u32 %v429, 7
        %v431 = vsub.s32 0, %v430
        %v432 = vrot.slane %v427, %v431
        %v433 = vlaneseq
        %v434 = vshrl.u32 %v433, 7
        %v435 = vsub.s32 0, %v434
        %v436 = vrot.slane %v428, %v435
        %vm437 = vcmp.eq.s32.totalorder %v432, 1
        %vm438 = vcmp.eq.s32.totalorder %v436, 1
        %v439 = vsel %vm437, %v410, 0.0
        %v440 = vsel %vm438, %v409, 0.0
        %v441 = vld [vmem:[%s4] sm:$0xf]
        %442 = vrot.lane.b32.xlu0 %v398, 16
        %v443 = vpop.permute.xlu0 %442
        %444 = vrot.lane.b32.xlu0 %v399, 16
        %v445 = vpop.permute.xlu0 %444
        %vm446 = vcmp.lt.s32.totalorder %v401, 16
        %v447 = vsel %vm446, %v443, %v445
        %v448 = vsel %vm446, %v445, %v443
        %v449 = vsel %vm411, 1, 0
        %v450 = vsel %vm412, 1, 0
        %vm451 = vcmp.eq.s32.totalorder %v449, 1
        %vm452 = vcmp.eq.s32.totalorder %v450, 1
        %v453 = vsel %vm451, %v448, 0.0
        %v454 = vsel %vm452, %v447, 0.0
        %s455 = scalar_lea.vmem %s4, 4
        %v456 = vld [vmem:[%s455] sm:$0xf]
        %v458 = vsel %vm314, %v456, 0
        %v461 = vsel %vm318, %v453, 0
        %v464 = vsel %vm318, %v454, 0
        %466 = vmatprep.subr.mxu0 0.0
        %467 = vmatpush1.msra.mxu0 0.0
        %468 = vmatprep.subr.mxu0 0.0
        %469 = vmatpush1.msra.mxu0 0.0
        %470 = vmatprep.subr.mxu0 0.0
        %471 = vmatpush1.msra.mxu0 0.0
        %472 = vmatprep.subr.mxu0 0.0
        %473 = vmatpush1.msra.mxu0 0.0
        %474 = vmatprep.subr.mxu0 0.0
        %475 = vmatpush1.msra.mxu0 0.0
        %476 = vmatprep.subr.mxu0 0.0
        %477 = vmatpush1.msra.mxu0 0.0
        %478 = vmatprep.subr.mxu0 0.0
        %479 = vmatpush1.msra.mxu0 0.0
        %480 = vmatprep.subr.mxu0 0.0
        %481 = vmatpush1.msra.mxu0 0.0
        %482 = vmatprep.subr.mxu0 0.0
        %483 = vmatpush1.msra.mxu0 0.0
        %484 = vmatprep.subr.mxu0 0.0
        %485 = vmatpush1.msra.mxu0 0.0
        %486 = vmatprep.subr.mxu0 0.0
        %487 = vmatpush1.msra.mxu0 0.0
        %488 = vmatprep.subr.mxu0 0.0
        %489 = vmatpush1.msra.mxu0 0.0
        %490 = vmatprep.subr.mxu0 0.0
        %491 = vmatpush1.msra.mxu0 0.0
        %492 = vmatprep.subr.mxu0 0.0
        %493 = vmatpush1.msra.mxu0 0.0
        %494 = vmatprep.subr.mxu0 0.0
        %495 = vmatpush1.msra.mxu0 0.0
        %496 = vmatprep.subr.mxu0 %v464
        %497 = vmatpush1.msra.mxu0 %v461
        %498 = vmatprep.subr.mxu0 0.0
        %499 = vmatpush2.msra.mxu0 0.0
        %500 = vmatprep.subr.mxu0 0.0
        %501 = vmatpush2.msra.mxu0 0.0
        %502 = vmatprep.subr.mxu0 0.0
        %503 = vmatpush2.msra.mxu0 0.0
        %504 = vmatprep.subr.mxu0 0.0
        %505 = vmatpush2.msra.mxu0 0.0
        %506 = vmatprep.subr.mxu0 0.0
        %507 = vmatpush2.msra.mxu0 0.0
        %508 = vmatprep.subr.mxu0 0.0
        %509 = vmatpush2.msra.mxu0 0.0
        %510 = vmatprep.subr.mxu0 0.0
        %511 = vmatpush2.msra.mxu0 0.0
        %512 = vmatprep.subr.mxu0 0.0
        %513 = vmatpush2.msra.mxu0 0.0
        %514 = vmatprep.subr.mxu0 0.0
        %515 = vmatpush2.msra.mxu0 0.0
        %516 = vmatprep.subr.mxu0 0.0
        %517 = vmatpush2.msra.mxu0 0.0
        %518 = vmatprep.subr.mxu0 0.0
        %519 = vmatpush2.msra.mxu0 0.0
        %520 = vmatprep.subr.mxu0 0.0
        %521 = vmatpush2.msra.mxu0 0.0
        %522 = vmatprep.subr.mxu0 0.0
        %523 = vmatpush2.msra.mxu0 0.0
        %524 = vmatprep.subr.mxu0 0.0
        %525 = vmatpush2.msra.mxu0 0.0
        %526 = vmatprep.subr.mxu0 0.0
        %527 = vmatpush2.msra.mxu0 0.0
        %528 = vmatprep.subr.mxu0 0.0
        %529 = vmatpush2.msra.mxu0 0.0
        %530 = vmatprep.mubr.f32.mxu0 0.0
        %531 = vmatmul.mubr.f32.gmra.mxu0 %v458
        %v532 = vpop.f32.mrf.mxu0
        %v533 = vadd.f32 0.0, %v532
        %v534 = vpop.f32.mrf.mxu0
        %v535 = vadd.f32 0.0, %v534
        %536 = vdwg.mxu0
        %v538 = vsel %vm314, %v441, 0
        %v541 = vsel %vm318, %v439, 0
        %v544 = vsel %vm318, %v440, 0
        %546 = vmatprep.subr.mxu0 0.0
        %547 = vmatpush1.msra.mxu0 0.0
        %548 = vmatprep.subr.mxu0 0.0
        %549 = vmatpush1.msra.mxu0 0.0
        %550 = vmatprep.subr.mxu0 0.0
        %551 = vmatpush1.msra.mxu0 0.0
        %552 = vmatprep.subr.mxu0 0.0
        %553 = vmatpush1.msra.mxu0 0.0
        %554 = vmatprep.subr.mxu0 0.0
        %555 = vmatpush1.msra.mxu0 0.0
        %556 = vmatprep.subr.mxu0 0.0
        %557 = vmatpush1.msra.mxu0 0.0
        %558 = vmatprep.subr.mxu0 0.0
        %559 = vmatpush1.msra.mxu0 0.0
        %560 = vmatprep.subr.mxu0 0.0
        %561 = vmatpush1.msra.mxu0 0.0
        %562 = vmatprep.subr.mxu0 0.0
        %563 = vmatpush1.msra.mxu0 0.0
        %564 = vmatprep.subr.mxu0 0.0
        %565 = vmatpush1.msra.mxu0 0.0
        %566 = vmatprep.subr.mxu0 0.0
        %567 = vmatpush1.msra.mxu0 0.0
        %568 = vmatprep.subr.mxu0 0.0
        %569 = vmatpush1.msra.mxu0 0.0
        %570 = vmatprep.subr.mxu0 0.0
        %571 = vmatpush1.msra.mxu0 0.0
        %572 = vmatprep.subr.mxu0 0.0
        %573 = vmatpush1.msra.mxu0 0.0
        %574 = vmatprep.subr.mxu0 0.0
        %575 = vmatpush1.msra.mxu0 0.0
        %576 = vmatprep.subr.mxu0 %v544
        %577 = vmatpush1.msra.mxu0 %v541
        %578 = vmatprep.subr.mxu0 0.0
        %579 = vmatpush2.msra.mxu0 0.0
        %580 = vmatprep.subr.mxu0 0.0
        %581 = vmatpush2.msra.mxu0 0.0
        %582 = vmatprep.subr.mxu0 0.0
        %583 = vmatpush2.msra.mxu0 0.0
        %584 = vmatprep.subr.mxu0 0.0
        %585 = vmatpush2.msra.mxu0 0.0
        %586 = vmatprep.subr.mxu0 0.0
        %587 = vmatpush2.msra.mxu0 0.0
        %588 = vmatprep.subr.mxu0 0.0
        %589 = vmatpush2.msra.mxu0 0.0
        %590 = vmatprep.subr.mxu0 0.0
        %591 = vmatpush2.msra.mxu0 0.0
        %592 = vmatprep.subr.mxu0 0.0
        %593 = vmatpush2.msra.mxu0 0.0
        %594 = vmatprep.subr.mxu0 0.0
        %595 = vmatpush2.msra.mxu0 0.0
        %596 = vmatprep.subr.mxu0 0.0
        %597 = vmatpush2.msra.mxu0 0.0
        %598 = vmatprep.subr.mxu0 0.0
        %599 = vmatpush2.msra.mxu0 0.0
        %600 = vmatprep.subr.mxu0 0.0
        %601 = vmatpush2.msra.mxu0 0.0
        %602 = vmatprep.subr.mxu0 0.0
        %603 = vmatpush2.msra.mxu0 0.0
        %604 = vmatprep.subr.mxu0 0.0
        %605 = vmatpush2.msra.mxu0 0.0
        %606 = vmatprep.subr.mxu0 0.0
        %607 = vmatpush2.msra.mxu0 0.0
        %608 = vmatprep.subr.mxu0 0.0
        %609 = vmatpush2.msra.mxu0 0.0
        %610 = vmatprep.mubr.f32.mxu0 0.0
        %611 = vmatmul.mubr.f32.gmra.mxu0 %v538
        %v612 = vpop.f32.mrf.mxu0
        %v613 = vadd.f32 %v533, %v612
        %v614 = vpop.f32.mrf.mxu0
        %v615 = vadd.f32 %v535, %v614
        %616 = vdwg.mxu0
        %617 = vrot.lane.b32.xlu0 %v398, 15
        %v618 = vpop.permute.xlu0 %617
        %619 = vrot.lane.b32.xlu0 %v399, 15
        %v620 = vpop.permute.xlu0 %619
        %vm621 = vcmp.lt.s32.totalorder %v401, 15
        %v622 = vsel %vm621, %v618, %v620
        %v623 = vsel %vm621, %v620, %v618
        %vm624 = vcmp.le.s32.totalorder %v403, 14
        %v625 = vsel %vm624, 1, 0
        %v626 = vlaneseq
        %v627 = vshrl.u32 %v626, 7
        %v628 = vsub.s32 0, %v627
        %v629 = vrot.slane %v625, %v628
        %v630 = vlaneseq
        %v631 = vshrl.u32 %v630, 7
        %v632 = vsub.s32 1, %v631
        %v633 = vrot.slane %v625, %v632
        %vm634 = vcmp.ne.s32.totalorder %v629, 0
        %vm635 = vcmp.ne.s32.totalorder %v633, 0
        %vm636 = vmand %vm411, %vm634
        %vm637 = vmand %vm412, %vm635
        %v638 = vsel %vm636, 1, 0
        %v639 = vsel %vm637, 1, 0
        %v640 = vlaneseq
        %v641 = vshrl.u32 %v640, 7
        %v642 = vsub.s32 0, %v641
        %v643 = vrot.slane %v638, %v642
        %v644 = vlaneseq
        %v645 = vshrl.u32 %v644, 7
        %v646 = vsub.s32 0, %v645
        %v647 = vrot.slane %v639, %v646
        %vm648 = vcmp.eq.s32.totalorder %v643, 1
        %vm649 = vcmp.eq.s32.totalorder %v647, 1
        %v650 = vsel %vm648, %v623, 0.0
        %v651 = vsel %vm649, %v622, 0.0
        %s652 = scalar_lea.vmem %s4, 8
        %v653 = vld [vmem:[%s652] sm:$0xf]
        %v655 = vsel %vm314, %v653, 0
        %v658 = vsel %vm318, %v650, 0
        %v661 = vsel %vm318, %v651, 0
        %663 = vmatprep.subr.mxu0 0.0
        %664 = vmatpush1.msra.mxu0 0.0
        %665 = vmatprep.subr.mxu0 0.0
        %666 = vmatpush1.msra.mxu0 0.0
        %667 = vmatprep.subr.mxu0 0.0
        %668 = vmatpush1.msra.mxu0 0.0
        %669 = vmatprep.subr.mxu0 0.0
        %670 = vmatpush1.msra.mxu0 0.0
        %671 = vmatprep.subr.mxu0 0.0
        %672 = vmatpush1.msra.mxu0 0.0
        %673 = vmatprep.subr.mxu0 0.0
        %674 = vmatpush1.msra.mxu0 0.0
        %675 = vmatprep.subr.mxu0 0.0
        %676 = vmatpush1.msra.mxu0 0.0
        %677 = vmatprep.subr.mxu0 0.0
        %678 = vmatpush1.msra.mxu0 0.0
        %679 = vmatprep.subr.mxu0 0.0
        %680 = vmatpush1.msra.mxu0 0.0
        %681 = vmatprep.subr.mxu0 0.0
        %682 = vmatpush1.msra.mxu0 0.0
        %683 = vmatprep.subr.mxu0 0.0
        %684 = vmatpush1.msra.mxu0 0.0
        %685 = vmatprep.subr.mxu0 0.0
        %686 = vmatpush1.msra.mxu0 0.0
        %687 = vmatprep.subr.mxu0 0.0
        %688 = vmatpush1.msra.mxu0 0.0
        %689 = vmatprep.subr.mxu0 0.0
        %690 = vmatpush1.msra.mxu0 0.0
        %691 = vmatprep.subr.mxu0 0.0
        %692 = vmatpush1.msra.mxu0 0.0
        %693 = vmatprep.subr.mxu0 %v661
        %694 = vmatpush1.msra.mxu0 %v658
        %695 = vmatprep.subr.mxu0 0.0
        %696 = vmatpush2.msra.mxu0 0.0
        %697 = vmatprep.subr.mxu0 0.0
        %698 = vmatpush2.msra.mxu0 0.0
        %699 = vmatprep.subr.mxu0 0.0
        %700 = vmatpush2.msra.mxu0 0.0
        %701 = vmatprep.subr.mxu0 0.0
        %702 = vmatpush2.msra.mxu0 0.0
        %703 = vmatprep.subr.mxu0 0.0
        %704 = vmatpush2.msra.mxu0 0.0
        %705 = vmatprep.subr.mxu0 0.0
        %706 = vmatpush2.msra.mxu0 0.0
        %707 = vmatprep.subr.mxu0 0.0
        %708 = vmatpush2.msra.mxu0 0.0
        %709 = vmatprep.subr.mxu0 0.0
        %710 = vmatpush2.msra.mxu0 0.0
        %711 = vmatprep.subr.mxu0 0.0
        %712 = vmatpush2.msra.mxu0 0.0
        %713 = vmatprep.subr.mxu0 0.0
        %714 = vmatpush2.msra.mxu0 0.0
        %715 = vmatprep.subr.mxu0 0.0
        %716 = vmatpush2.msra.mxu0 0.0
        %717 = vmatprep.subr.mxu0 0.0
        %718 = vmatpush2.msra.mxu0 0.0
        %719 = vmatprep.subr.mxu0 0.0
        %720 = vmatpush2.msra.mxu0 0.0
        %721 = vmatprep.subr.mxu0 0.0
        %722 = vmatpush2.msra.mxu0 0.0
        %723 = vmatprep.subr.mxu0 0.0
        %724 = vmatpush2.msra.mxu0 0.0
        %725 = vmatprep.subr.mxu0 0.0
        %726 = vmatpush2.msra.mxu0 0.0
        %727 = vmatprep.mubr.f32.mxu0 0.0
        %728 = vmatmul.mubr.f32.gmra.mxu0 %v655
        %v729 = vpop.f32.mrf.mxu0
        %v730 = vadd.f32 0.0, %v729
        %v731 = vpop.f32.mrf.mxu0
        %v732 = vadd.f32 0.0, %v731
        %733 = vdwg.mxu0
        %v734 = vadd.f32 %v613, %v730
        %v735 = vadd.f32 %v615, %v732
        %736 = vrot.lane.b32.xlu0 %v398, 1
        %v737 = vpop.permute.xlu0 %736
        %738 = vrot.lane.b32.xlu0 %v399, 1
        %v739 = vpop.permute.xlu0 %738
        %vm740 = vcmp.lt.s32.totalorder %v401, 1
        %v741 = vsel %vm740, %v737, %v739
        %v742 = vsel %vm740, %v739, %v737
        %vm743 = vcmp.eq.s32.totalorder %v418, 1
        %vm744 = vcmp.eq.s32.totalorder %v422, 1
        %v745 = vsel %vm743, %v742, 0.0
        %v746 = vsel %vm744, %v741, 0.0
        %s747 = scalar_lea.vmem %s4, 12
        %v748 = vld [vmem:[%s747] sm:$0xf]
        %v750 = vsel %vm314, %v748, 0
        %v753 = vsel %vm318, %v745, 0
        %v756 = vsel %vm318, %v746, 0
        %758 = vmatprep.subr.mxu0 0.0
        %759 = vmatpush1.msra.mxu0 0.0
        %760 = vmatprep.subr.mxu0 0.0
        %761 = vmatpush1.msra.mxu0 0.0
        %762 = vmatprep.subr.mxu0 0.0
        %763 = vmatpush1.msra.mxu0 0.0
        %764 = vmatprep.subr.mxu0 0.0
        %765 = vmatpush1.msra.mxu0 0.0
        %766 = vmatprep.subr.mxu0 0.0
        %767 = vmatpush1.msra.mxu0 0.0
        %768 = vmatprep.subr.mxu0 0.0
        %769 = vmatpush1.msra.mxu0 0.0
        %770 = vmatprep.subr.mxu0 0.0
        %771 = vmatpush1.msra.mxu0 0.0
        %772 = vmatprep.subr.mxu0 0.0
        %773 = vmatpush1.msra.mxu0 0.0
        %774 = vmatprep.subr.mxu0 0.0
        %775 = vmatpush1.msra.mxu0 0.0
        %776 = vmatprep.subr.mxu0 0.0
        %777 = vmatpush1.msra.mxu0 0.0
        %778 = vmatprep.subr.mxu0 0.0
        %779 = vmatpush1.msra.mxu0 0.0
        %780 = vmatprep.subr.mxu0 0.0
        %781 = vmatpush1.msra.mxu0 0.0
        %782 = vmatprep.subr.mxu0 0.0
        %783 = vmatpush1.msra.mxu0 0.0
        %784 = vmatprep.subr.mxu0 0.0
        %785 = vmatpush1.msra.mxu0 0.0
        %786 = vmatprep.subr.mxu0 0.0
        %787 = vmatpush1.msra.mxu0 0.0
        %788 = vmatprep.subr.mxu0 %v756
        %789 = vmatpush1.msra.mxu0 %v753
        %790 = vmatprep.subr.mxu0 0.0
        %791 = vmatpush2.msra.mxu0 0.0
        %792 = vmatprep.subr.mxu0 0.0
        %793 = vmatpush2.msra.mxu0 0.0
        %794 = vmatprep.subr.mxu0 0.0
        %795 = vmatpush2.msra.mxu0 0.0
        %796 = vmatprep.subr.mxu0 0.0
        %797 = vmatpush2.msra.mxu0 0.0
        %798 = vmatprep.subr.mxu0 0.0
        %799 = vmatpush2.msra.mxu0 0.0
        %800 = vmatprep.subr.mxu0 0.0
        %801 = vmatpush2.msra.mxu0 0.0
        %802 = vmatprep.subr.mxu0 0.0
        %803 = vmatpush2.msra.mxu0 0.0
        %804 = vmatprep.subr.mxu0 0.0
        %805 = vmatpush2.msra.mxu0 0.0
        %806 = vmatprep.subr.mxu0 0.0
        %807 = vmatpush2.msra.mxu0 0.0
        %808 = vmatprep.subr.mxu0 0.0
        %809 = vmatpush2.msra.mxu0 0.0
        %810 = vmatprep.subr.mxu0 0.0
        %811 = vmatpush2.msra.mxu0 0.0
        %812 = vmatprep.subr.mxu0 0.0
        %813 = vmatpush2.msra.mxu0 0.0
        %814 = vmatprep.subr.mxu0 0.0
        %815 = vmatpush2.msra.mxu0 0.0
        %816 = vmatprep.subr.mxu0 0.0
        %817 = vmatpush2.msra.mxu0 0.0
        %818 = vmatprep.subr.mxu0 0.0
        %819 = vmatpush2.msra.mxu0 0.0
        %820 = vmatprep.subr.mxu0 0.0
        %821 = vmatpush2.msra.mxu0 0.0
        %822 = vmatprep.mubr.f32.mxu0 0.0
        %823 = vmatmul.mubr.f32.gmra.mxu0 %v750
        %v824 = vpop.f32.mrf.mxu0
        %v825 = vadd.f32 0.0, %v824
        %v826 = vpop.f32.mrf.mxu0
        %v827 = vadd.f32 0.0, %v826
        %828 = vdwg.mxu0
        %v829 = vadd.f32 %v734, %v825
        %v830 = vadd.f32 %v735, %v827
        %s831 = scalar_lea.vmem %s4, 16
        %v832 = vld [vmem:[%s831] sm:$0xf]
        %v834 = vsel %vm314, %v832, 0
        %v837 = vsel %vm318, %v398, 0
        %v840 = vsel %vm318, %v399, 0
        %842 = vmatprep.subr.mxu0 0.0
        %843 = vmatpush1.msra.mxu0 0.0
        %844 = vmatprep.subr.mxu0 0.0
        %845 = vmatpush1.msra.mxu0 0.0
        %846 = vmatprep.subr.mxu0 0.0
        %847 = vmatpush1.msra.mxu0 0.0
        %848 = vmatprep.subr.mxu0 0.0
        %849 = vmatpush1.msra.mxu0 0.0
        %850 = vmatprep.subr.mxu0 0.0
        %851 = vmatpush1.msra.mxu0 0.0
        %852 = vmatprep.subr.mxu0 0.0
        %853 = vmatpush1.msra.mxu0 0.0
        %854 = vmatprep.subr.mxu0 0.0
        %855 = vmatpush1.msra.mxu0 0.0
        %856 = vmatprep.subr.mxu0 0.0
        %857 = vmatpush1.msra.mxu0 0.0
        %858 = vmatprep.subr.mxu0 0.0
        %859 = vmatpush1.msra.mxu0 0.0
        %860 = vmatprep.subr.mxu0 0.0
        %861 = vmatpush1.msra.mxu0 0.0
        %862 = vmatprep.subr.mxu0 0.0
        %863 = vmatpush1.msra.mxu0 0.0
        %864 = vmatprep.subr.mxu0 0.0
        %865 = vmatpush1.msra.mxu0 0.0
        %866 = vmatprep.subr.mxu0 0.0
        %867 = vmatpush1.msra.mxu0 0.0
        %868 = vmatprep.subr.mxu0 0.0
        %869 = vmatpush1.msra.mxu0 0.0
        %870 = vmatprep.subr.mxu0 0.0
        %871 = vmatpush1.msra.mxu0 0.0
        %872 = vmatprep.subr.mxu0 %v840
        %873 = vmatpush1.msra.mxu0 %v837
        %874 = vmatprep.subr.mxu0 0.0
        %875 = vmatpush2.msra.mxu0 0.0
        %876 = vmatprep.subr.mxu0 0.0
        %877 = vmatpush2.msra.mxu0 0.0
        %878 = vmatprep.subr.mxu0 0.0
        %879 = vmatpush2.msra.mxu0 0.0
        %880 = vmatprep.subr.mxu0 0.0
        %881 = vmatpush2.msra.mxu0 0.0
        %882 = vmatprep.subr.mxu0 0.0
        %883 = vmatpush2.msra.mxu0 0.0
        %884 = vmatprep.subr.mxu0 0.0
        %885 = vmatpush2.msra.mxu0 0.0
        %886 = vmatprep.subr.mxu0 0.0
        %887 = vmatpush2.msra.mxu0 0.0
        %888 = vmatprep.subr.mxu0 0.0
        %889 = vmatpush2.msra.mxu0 0.0
        %890 = vmatprep.subr.mxu0 0.0
        %891 = vmatpush2.msra.mxu0 0.0
        %892 = vmatprep.subr.mxu0 0.0
        %893 = vmatpush2.msra.mxu0 0.0
        %894 = vmatprep.subr.mxu0 0.0
        %895 = vmatpush2.msra.mxu0 0.0
        %896 = vmatprep.subr.mxu0 0.0
        %897 = vmatpush2.msra.mxu0 0.0
        %898 = vmatprep.subr.mxu0 0.0
        %899 = vmatpush2.msra.mxu0 0.0
        %900 = vmatprep.subr.mxu0 0.0
        %901 = vmatpush2.msra.mxu0 0.0
        %902 = vmatprep.subr.mxu0 0.0
        %903 = vmatpush2.msra.mxu0 0.0
        %904 = vmatprep.subr.mxu0 0.0
        %905 = vmatpush2.msra.mxu0 0.0
        %906 = vmatprep.mubr.f32.mxu0 0.0
        %907 = vmatmul.mubr.f32.gmra.mxu0 %v834
        %v908 = vpop.f32.mrf.mxu0
        %v909 = vadd.f32 0.0, %v908
        %v910 = vpop.f32.mrf.mxu0
        %v911 = vadd.f32 0.0, %v910
        %912 = vdwg.mxu0
        %v913 = vadd.f32 %v829, %v909
        %v914 = vadd.f32 %v830, %v911
        %915 = vrot.lane.b32.xlu0 %v398, 127
        %v916 = vpop.permute.xlu0 %915
        %917 = vrot.lane.b32.xlu0 %v399, 127
        %v918 = vpop.permute.xlu0 %917
        %vm919 = vcmp.lt.s32.totalorder %v401, 127
        %v920 = vsel %vm919, %v916, %v918
        %v921 = vsel %vm919, %v918, %v916
        %vm922 = vcmp.eq.s32.totalorder %v629, 1
        %vm923 = vcmp.eq.s32.totalorder %v633, 1
        %v924 = vsel %vm922, %v920, 0.0
        %v925 = vsel %vm923, %v921, 0.0
        %s926 = scalar_lea.vmem %s4, 20
        %v927 = vld [vmem:[%s926] sm:$0xf]
        %v929 = vsel %vm314, %v927, 0
        %v932 = vsel %vm318, %v924, 0
        %v935 = vsel %vm318, %v925, 0
        %937 = vmatprep.subr.mxu0 0.0
        %938 = vmatpush1.msra.mxu0 0.0
        %939 = vmatprep.subr.mxu0 0.0
        %940 = vmatpush1.msra.mxu0 0.0
        %941 = vmatprep.subr.mxu0 0.0
        %942 = vmatpush1.msra.mxu0 0.0
        %943 = vmatprep.subr.mxu0 0.0
        %944 = vmatpush1.msra.mxu0 0.0
        %945 = vmatprep.subr.mxu0 0.0
        %946 = vmatpush1.msra.mxu0 0.0
        %947 = vmatprep.subr.mxu0 0.0
        %948 = vmatpush1.msra.mxu0 0.0
        %949 = vmatprep.subr.mxu0 0.0
        %950 = vmatpush1.msra.mxu0 0.0
        %951 = vmatprep.subr.mxu0 0.0
        %952 = vmatpush1.msra.mxu0 0.0
        %953 = vmatprep.subr.mxu0 0.0
        %954 = vmatpush1.msra.mxu0 0.0
        %955 = vmatprep.subr.mxu0 0.0
        %956 = vmatpush1.msra.mxu0 0.0
        %957 = vmatprep.subr.mxu0 0.0
        %958 = vmatpush1.msra.mxu0 0.0
        %959 = vmatprep.subr.mxu0 0.0
        %960 = vmatpush1.msra.mxu0 0.0
        %961 = vmatprep.subr.mxu0 0.0
        %962 = vmatpush1.msra.mxu0 0.0
        %963 = vmatprep.subr.mxu0 0.0
        %964 = vmatpush1.msra.mxu0 0.0
        %965 = vmatprep.subr.mxu0 0.0
        %966 = vmatpush1.msra.mxu0 0.0
        %967 = vmatprep.subr.mxu0 %v935
        %968 = vmatpush1.msra.mxu0 %v932
        %969 = vmatprep.subr.mxu0 0.0
        %970 = vmatpush2.msra.mxu0 0.0
        %971 = vmatprep.subr.mxu0 0.0
        %972 = vmatpush2.msra.mxu0 0.0
        %973 = vmatprep.subr.mxu0 0.0
        %974 = vmatpush2.msra.mxu0 0.0
        %975 = vmatprep.subr.mxu0 0.0
        %976 = vmatpush2.msra.mxu0 0.0
        %977 = vmatprep.subr.mxu0 0.0
        %978 = vmatpush2.msra.mxu0 0.0
        %979 = vmatprep.subr.mxu0 0.0
        %980 = vmatpush2.msra.mxu0 0.0
        %981 = vmatprep.subr.mxu0 0.0
        %982 = vmatpush2.msra.mxu0 0.0
        %983 = vmatprep.subr.mxu0 0.0
        %984 = vmatpush2.msra.mxu0 0.0
        %985 = vmatprep.subr.mxu0 0.0
        %986 = vmatpush2.msra.mxu0 0.0
        %987 = vmatprep.subr.mxu0 0.0
        %988 = vmatpush2.msra.mxu0 0.0
        %989 = vmatprep.subr.mxu0 0.0
        %990 = vmatpush2.msra.mxu0 0.0
        %991 = vmatprep.subr.mxu0 0.0
        %992 = vmatpush2.msra.mxu0 0.0
        %993 = vmatprep.subr.mxu0 0.0
        %994 = vmatpush2.msra.mxu0 0.0
        %995 = vmatprep.subr.mxu0 0.0
        %996 = vmatpush2.msra.mxu0 0.0
        %997 = vmatprep.subr.mxu0 0.0
        %998 = vmatpush2.msra.mxu0 0.0
        %999 = vmatprep.subr.mxu0 0.0
        %1000 = vmatpush2.msra.mxu0 0.0
        %1001 = vmatprep.mubr.f32.mxu0 0.0
        %1002 = vmatmul.mubr.f32.gmra.mxu0 %v929
        %v1003 = vpop.f32.mrf.mxu0
        %v1004 = vadd.f32 0.0, %v1003
        %v1005 = vpop.f32.mrf.mxu0
        %v1006 = vadd.f32 0.0, %v1005
        %1007 = vdwg.mxu0
        %v1008 = vadd.f32 %v913, %v1004
        %v1009 = vadd.f32 %v914, %v1006
        %1010 = vrot.lane.b32.xlu0 %v398, 113
        %v1011 = vpop.permute.xlu0 %1010
        %1012 = vrot.lane.b32.xlu0 %v399, 113
        %v1013 = vpop.permute.xlu0 %1012
        %vm1014 = vcmp.lt.s32.totalorder %v401, 113
        %v1015 = vsel %vm1014, %v1011, %v1013
        %v1016 = vsel %vm1014, %v1013, %v1011
        %vm1017 = vcmp.lt.s32.totalorder %v401, 240
        %vm1018 = vcmp.lt.s32.totalorder %v402, 240
        %vm1019 = vmand %vm1017, %vm423
        %vm1020 = vmand %vm1018, %vm424
        %v1021 = vsel %vm1019, 1, 0
        %v1022 = vsel %vm1020, 1, 0
        %v1023 = vlaneseq
        %v1024 = vshrl.u32 %v1023, 7
        %v1025 = vsub.s32 0, %v1024
        %v1026 = vrot.slane %v1021, %v1025
        %v1027 = vlaneseq
        %v1028 = vshrl.u32 %v1027, 7
        %v1029 = vsub.s32 0, %v1028
        %v1030 = vrot.slane %v1022, %v1029
        %vm1031 = vcmp.eq.s32.totalorder %v1026, 1
        %vm1032 = vcmp.eq.s32.totalorder %v1030, 1
        %v1033 = vsel %vm1031, %v1015, 0.0
        %v1034 = vsel %vm1032, %v1016, 0.0
        %s1035 = scalar_lea.vmem %s4, 24
        %v1036 = vld [vmem:[%s1035] sm:$0xf]
        %v1038 = vsel %vm314, %v1036, 0
        %v1041 = vsel %vm318, %v1033, 0
        %v1044 = vsel %vm318, %v1034, 0
        %1046 = vmatprep.subr.mxu0 0.0
        %1047 = vmatpush1.msra.mxu0 0.0
        %1048 = vmatprep.subr.mxu0 0.0
        %1049 = vmatpush1.msra.mxu0 0.0
        %1050 = vmatprep.subr.mxu0 0.0
        %1051 = vmatpush1.msra.mxu0 0.0
        %1052 = vmatprep.subr.mxu0 0.0
        %1053 = vmatpush1.msra.mxu0 0.0
        %1054 = vmatprep.subr.mxu0 0.0
        %1055 = vmatpush1.msra.mxu0 0.0
        %1056 = vmatprep.subr.mxu0 0.0
        %1057 = vmatpush1.msra.mxu0 0.0
        %1058 = vmatprep.subr.mxu0 0.0
        %1059 = vmatpush1.msra.mxu0 0.0
        %1060 = vmatprep.subr.mxu0 0.0
        %1061 = vmatpush1.msra.mxu0 0.0
        %1062 = vmatprep.subr.mxu0 0.0
        %1063 = vmatpush1.msra.mxu0 0.0
        %1064 = vmatprep.subr.mxu0 0.0
        %1065 = vmatpush1.msra.mxu0 0.0
        %1066 = vmatprep.subr.mxu0 0.0
        %1067 = vmatpush1.msra.mxu0 0.0
        %1068 = vmatprep.subr.mxu0 0.0
        %1069 = vmatpush1.msra.mxu0 0.0
        %1070 = vmatprep.subr.mxu0 0.0
        %1071 = vmatpush1.msra.mxu0 0.0
        %1072 = vmatprep.subr.mxu0 0.0
        %1073 = vmatpush1.msra.mxu0 0.0
        %1074 = vmatprep.subr.mxu0 0.0
        %1075 = vmatpush1.msra.mxu0 0.0
        %1076 = vmatprep.subr.mxu0 %v1044
        %1077 = vmatpush1.msra.mxu0 %v1041
        %1078 = vmatprep.subr.mxu0 0.0
        %1079 = vmatpush2.msra.mxu0 0.0
        %1080 = vmatprep.subr.mxu0 0.0
        %1081 = vmatpush2.msra.mxu0 0.0
        %1082 = vmatprep.subr.mxu0 0.0
        %1083 = vmatpush2.msra.mxu0 0.0
        %1084 = vmatprep.subr.mxu0 0.0
        %1085 = vmatpush2.msra.mxu0 0.0
        %1086 = vmatprep.subr.mxu0 0.0
        %1087 = vmatpush2.msra.mxu0 0.0
        %1088 = vmatprep.subr.mxu0 0.0
        %1089 = vmatpush2.msra.mxu0 0.0
        %1090 = vmatprep.subr.mxu0 0.0
        %1091 = vmatpush2.msra.mxu0 0.0
        %1092 = vmatprep.subr.mxu0 0.0
        %1093 = vmatpush2.msra.mxu0 0.0
        %1094 = vmatprep.subr.mxu0 0.0
        %1095 = vmatpush2.msra.mxu0 0.0
        %1096 = vmatprep.subr.mxu0 0.0
        %1097 = vmatpush2.msra.mxu0 0.0
        %1098 = vmatprep.subr.mxu0 0.0
        %1099 = vmatpush2.msra.mxu0 0.0
        %1100 = vmatprep.subr.mxu0 0.0
        %1101 = vmatpush2.msra.mxu0 0.0
        %1102 = vmatprep.subr.mxu0 0.0
        %1103 = vmatpush2.msra.mxu0 0.0
        %1104 = vmatprep.subr.mxu0 0.0
        %1105 = vmatpush2.msra.mxu0 0.0
        %1106 = vmatprep.subr.mxu0 0.0
        %1107 = vmatpush2.msra.mxu0 0.0
        %1108 = vmatprep.subr.mxu0 0.0
        %1109 = vmatpush2.msra.mxu0 0.0
        %1110 = vmatprep.mubr.f32.mxu0 0.0
        %1111 = vmatmul.mubr.f32.gmra.mxu0 %v1038
        %v1112 = vpop.f32.mrf.mxu0
        %v1113 = vadd.f32 0.0, %v1112
        %v1114 = vpop.f32.mrf.mxu0
        %v1115 = vadd.f32 0.0, %v1114
        %1116 = vdwg.mxu0
        %v1117 = vadd.f32 %v1008, %v1113
        %v1118 = vadd.f32 %v1009, %v1115
        %1119 = vrot.lane.b32.xlu0 %v398, 112
        %v1120 = vpop.permute.xlu0 %1119
        %1121 = vrot.lane.b32.xlu0 %v399, 112
        %v1122 = vpop.permute.xlu0 %1121
        %vm1123 = vcmp.lt.s32.totalorder %v401, 112
        %v1124 = vsel %vm1123, %v1120, %v1122
        %v1125 = vsel %vm1123, %v1122, %v1120
        %v1126 = vsel %vm1017, 1, 0
        %v1127 = vsel %vm1018, 1, 0
        %vm1128 = vcmp.eq.s32.totalorder %v1126, 1
        %vm1129 = vcmp.eq.s32.totalorder %v1127, 1
        %v1130 = vsel %vm1128, %v1124, 0.0
        %v1131 = vsel %vm1129, %v1125, 0.0
        %s1132 = scalar_lea.vmem %s4, 28
        %v1133 = vld [vmem:[%s1132] sm:$0xf]
        %v1135 = vsel %vm314, %v1133, 0
        %v1138 = vsel %vm318, %v1130, 0
        %v1141 = vsel %vm318, %v1131, 0
        %1143 = vmatprep.subr.mxu0 0.0
        %1144 = vmatpush1.msra.mxu0 0.0
        %1145 = vmatprep.subr.mxu0 0.0
        %1146 = vmatpush1.msra.mxu0 0.0
        %1147 = vmatprep.subr.mxu0 0.0
        %1148 = vmatpush1.msra.mxu0 0.0
        %1149 = vmatprep.subr.mxu0 0.0
        %1150 = vmatpush1.msra.mxu0 0.0
        %1151 = vmatprep.subr.mxu0 0.0
        %1152 = vmatpush1.msra.mxu0 0.0
        %1153 = vmatprep.subr.mxu0 0.0
        %1154 = vmatpush1.msra.mxu0 0.0
        %1155 = vmatprep.subr.mxu0 0.0
        %1156 = vmatpush1.msra.mxu0 0.0
        %1157 = vmatprep.subr.mxu0 0.0
        %1158 = vmatpush1.msra.mxu0 0.0
        %1159 = vmatprep.subr.mxu0 0.0
        %1160 = vmatpush1.msra.mxu0 0.0
        %1161 = vmatprep.subr.mxu0 0.0
        %1162 = vmatpush1.msra.mxu0 0.0
        %1163 = vmatprep.subr.mxu0 0.0
        %1164 = vmatpush1.msra.mxu0 0.0
        %1165 = vmatprep.subr.mxu0 0.0
        %1166 = vmatpush1.msra.mxu0 0.0
        %1167 = vmatprep.subr.mxu0 0.0
        %1168 = vmatpush1.msra.mxu0 0.0
        %1169 = vmatprep.subr.mxu0 0.0
        %1170 = vmatpush1.msra.mxu0 0.0
        %1171 = vmatprep.subr.mxu0 0.0
        %1172 = vmatpush1.msra.mxu0 0.0
        %1173 = vmatprep.subr.mxu0 %v1141
        %1174 = vmatpush1.msra.mxu0 %v1138
        %1175 = vmatprep.subr.mxu0 0.0
        %1176 = vmatpush2.msra.mxu0 0.0
        %1177 = vmatprep.subr.mxu0 0.0
        %1178 = vmatpush2.msra.mxu0 0.0
        %1179 = vmatprep.subr.mxu0 0.0
        %1180 = vmatpush2.msra.mxu0 0.0
        %1181 = vmatprep.subr.mxu0 0.0
        %1182 = vmatpush2.msra.mxu0 0.0
        %1183 = vmatprep.subr.mxu0 0.0
        %1184 = vmatpush2.msra.mxu0 0.0
        %1185 = vmatprep.subr.mxu0 0.0
        %1186 = vmatpush2.msra.mxu0 0.0
        %1187 = vmatprep.subr.mxu0 0.0
        %1188 = vmatpush2.msra.mxu0 0.0
        %1189 = vmatprep.subr.mxu0 0.0
        %1190 = vmatpush2.msra.mxu0 0.0
        %1191 = vmatprep.subr.mxu0 0.0
        %1192 = vmatpush2.msra.mxu0 0.0
        %1193 = vmatprep.subr.mxu0 0.0
        %1194 = vmatpush2.msra.mxu0 0.0
        %1195 = vmatprep.subr.mxu0 0.0
        %1196 = vmatpush2.msra.mxu0 0.0
        %1197 = vmatprep.subr.mxu0 0.0
        %1198 = vmatpush2.msra.mxu0 0.0
        %1199 = vmatprep.subr.mxu0 0.0
        %1200 = vmatpush2.msra.mxu0 0.0
        %1201 = vmatprep.subr.mxu0 0.0
        %1202 = vmatpush2.msra.mxu0 0.0
        %1203 = vmatprep.subr.mxu0 0.0
        %1204 = vmatpush2.msra.mxu0 0.0
        %1205 = vmatprep.subr.mxu0 0.0
        %1206 = vmatpush2.msra.mxu0 0.0
        %1207 = vmatprep.mubr.f32.mxu0 0.0
        %1208 = vmatmul.mubr.f32.gmra.mxu0 %v1135
        %v1209 = vpop.f32.mrf.mxu0
        %v1210 = vadd.f32 0.0, %v1209
        %v1211 = vpop.f32.mrf.mxu0
        %v1212 = vadd.f32 0.0, %v1211
        %1213 = vdwg.mxu0
        %v1214 = vadd.f32 %v1117, %v1210
        %v1215 = vadd.f32 %v1118, %v1212
        %1216 = vrot.lane.b32.xlu0 %v398, 111
        %v1217 = vpop.permute.xlu0 %1216
        %1218 = vrot.lane.b32.xlu0 %v399, 111
        %v1219 = vpop.permute.xlu0 %1218
        %vm1220 = vcmp.lt.s32.totalorder %v401, 111
        %v1221 = vsel %vm1220, %v1217, %v1219
        %v1222 = vsel %vm1220, %v1219, %v1217
        %vm1223 = vmand %vm1017, %vm634
        %vm1224 = vmand %vm1018, %vm635
        %v1225 = vsel %vm1223, 1, 0
        %v1226 = vsel %vm1224, 1, 0
        %v1227 = vlaneseq
        %v1228 = vshrl.u32 %v1227, 7
        %v1229 = vsub.s32 0, %v1228
        %v1230 = vrot.slane %v1225, %v1229
        %v1231 = vlaneseq
        %v1232 = vshrl.u32 %v1231, 7
        %v1233 = vsub.s32 0, %v1232
        %v1234 = vrot.slane %v1226, %v1233
        %vm1235 = vcmp.eq.s32.totalorder %v1230, 1
        %vm1236 = vcmp.eq.s32.totalorder %v1234, 1
        %v1237 = vsel %vm1235, %v1221, 0.0
        %v1238 = vsel %vm1236, %v1222, 0.0
        %s1239 = scalar_lea.vmem %s4, 32
        %v1240 = vld [vmem:[%s1239] sm:$0xf]
        %v1242 = vsel %vm314, %v1240, 0
        %v1245 = vsel %vm318, %v1237, 0
        %v1248 = vsel %vm318, %v1238, 0
        %1250 = vmatprep.subr.mxu0 0.0
        %1251 = vmatpush1.msra.mxu0 0.0
        %1252 = vmatprep.subr.mxu0 0.0
        %1253 = vmatpush1.msra.mxu0 0.0
        %1254 = vmatprep.subr.mxu0 0.0
        %1255 = vmatpush1.msra.mxu0 0.0
        %1256 = vmatprep.subr.mxu0 0.0
        %1257 = vmatpush1.msra.mxu0 0.0
        %1258 = vmatprep.subr.mxu0 0.0
        %1259 = vmatpush1.msra.mxu0 0.0
        %1260 = vmatprep.subr.mxu0 0.0
        %1261 = vmatpush1.msra.mxu0 0.0
        %1262 = vmatprep.subr.mxu0 0.0
        %1263 = vmatpush1.msra.mxu0 0.0
        %1264 = vmatprep.subr.mxu0 0.0
        %1265 = vmatpush1.msra.mxu0 0.0
        %1266 = vmatprep.subr.mxu0 0.0
        %1267 = vmatpush1.msra.mxu0 0.0
        %1268 = vmatprep.subr.mxu0 0.0
        %1269 = vmatpush1.msra.mxu0 0.0
        %1270 = vmatprep.subr.mxu0 0.0
        %1271 = vmatpush1.msra.mxu0 0.0
        %1272 = vmatprep.subr.mxu0 0.0
        %1273 = vmatpush1.msra.mxu0 0.0
        %1274 = vmatprep.subr.mxu0 0.0
        %1275 = vmatpush1.msra.mxu0 0.0
        %1276 = vmatprep.subr.mxu0 0.0
        %1277 = vmatpush1.msra.mxu0 0.0
        %1278 = vmatprep.subr.mxu0 0.0
        %1279 = vmatpush1.msra.mxu0 0.0
        %1280 = vmatprep.subr.mxu0 %v1248
        %1281 = vmatpush1.msra.mxu0 %v1245
        %1282 = vmatprep.subr.mxu0 0.0
        %1283 = vmatpush2.msra.mxu0 0.0
        %1284 = vmatprep.subr.mxu0 0.0
        %1285 = vmatpush2.msra.mxu0 0.0
        %1286 = vmatprep.subr.mxu0 0.0
        %1287 = vmatpush2.msra.mxu0 0.0
        %1288 = vmatprep.subr.mxu0 0.0
        %1289 = vmatpush2.msra.mxu0 0.0
        %1290 = vmatprep.subr.mxu0 0.0
        %1291 = vmatpush2.msra.mxu0 0.0
        %1292 = vmatprep.subr.mxu0 0.0
        %1293 = vmatpush2.msra.mxu0 0.0
        %1294 = vmatprep.subr.mxu0 0.0
        %1295 = vmatpush2.msra.mxu0 0.0
        %1296 = vmatprep.subr.mxu0 0.0
        %1297 = vmatpush2.msra.mxu0 0.0
        %1298 = vmatprep.subr.mxu0 0.0
        %1299 = vmatpush2.msra.mxu0 0.0
        %1300 = vmatprep.subr.mxu0 0.0
        %1301 = vmatpush2.msra.mxu0 0.0
        %1302 = vmatprep.subr.mxu0 0.0
        %1303 = vmatpush2.msra.mxu0 0.0
        %1304 = vmatprep.subr.mxu0 0.0
        %1305 = vmatpush2.msra.mxu0 0.0
        %1306 = vmatprep.subr.mxu0 0.0
        %1307 = vmatpush2.msra.mxu0 0.0
        %1308 = vmatprep.subr.mxu0 0.0
        %1309 = vmatpush2.msra.mxu0 0.0
        %1310 = vmatprep.subr.mxu0 0.0
        %1311 = vmatpush2.msra.mxu0 0.0
        %1312 = vmatprep.subr.mxu0 0.0
        %1313 = vmatpush2.msra.mxu0 0.0
        %1314 = vmatprep.mubr.f32.mxu0 0.0
        %1315 = vmatmul.mubr.f32.gmra.mxu0 %v1242
        %v1316 = vpop.f32.mrf.mxu0
        %v1317 = vadd.f32 0.0, %v1316
        %v1318 = vpop.f32.mrf.mxu0
        %v1319 = vadd.f32 0.0, %v1318
        %1320 = vdwg.mxu0
        %v1321 = vadd.f32 %v1214, %v1317
        %v1322 = vadd.f32 %v1215, %v1319
        %v1323 = vld [vmem:[%s5] sm:$0xf]
        %1325 = vset.pattern.permute.xlu0 0
        %1326 = vperm.xlu0 %1325, %v1323
        %v1327 = vpop.permute.xlu0 %1326
        %v1329 = vadd.f32 %v1321, %v1327
        %v1330 = vadd.f32 %v1322, %v1327
        %vm1331 = vcmp.gt.f32.partialorder %v1329, 0.0
        %vm1332 = vcmp.gt.f32.partialorder %v1330, 0.0
        %v1333 = vmul.f32 %v1329, 0.01
        %v1334 = vmul.f32 %v1330, 0.01
        %v1335 = vsel %vm1331, %v1329, %v1333
        %v1336 = vsel %vm1332, %v1330, %v1334
        %v1337 = vld [vmem:[%s6] sm:$0xf]
        %v1338 = vld [vmem:[%s7] sm:$0xf]
        %1340 = vset.pattern.permute.xlu0 0
        %1341 = vperm.xlu0 %1340, %v1338
        %v1342 = vpop.permute.xlu0 %1341
        %v1345 = vsel %vm314, %v1337, 0
        %v1348 = vsel %vm318, %v1335, 0
        %v1351 = vsel %vm318, %v1336, 0
        %1353 = vmatprep.subr.mxu0 0.0
        %1354 = vmatpush1.msra.mxu0 0.0
        %1355 = vmatprep.subr.mxu0 0.0
        %1356 = vmatpush1.msra.mxu0 0.0
        %1357 = vmatprep.subr.mxu0 0.0
        %1358 = vmatpush1.msra.mxu0 0.0
        %1359 = vmatprep.subr.mxu0 0.0
        %1360 = vmatpush1.msra.mxu0 0.0
        %1361 = vmatprep.subr.mxu0 0.0
        %1362 = vmatpush1.msra.mxu0 0.0
        %1363 = vmatprep.subr.mxu0 0.0
        %1364 = vmatpush1.msra.mxu0 0.0
        %1365 = vmatprep.subr.mxu0 0.0
        %1366 = vmatpush1.msra.mxu0 0.0
        %1367 = vmatprep.subr.mxu0 0.0
        %1368 = vmatpush1.msra.mxu0 0.0
        %1369 = vmatprep.subr.mxu0 0.0
        %1370 = vmatpush1.msra.mxu0 0.0
        %1371 = vmatprep.subr.mxu0 0.0
        %1372 = vmatpush1.msra.mxu0 0.0
        %1373 = vmatprep.subr.mxu0 0.0
        %1374 = vmatpush1.msra.mxu0 0.0
        %1375 = vmatprep.subr.mxu0 0.0
        %1376 = vmatpush1.msra.mxu0 0.0
        %1377 = vmatprep.subr.mxu0 0.0
        %1378 = vmatpush1.msra.mxu0 0.0
        %1379 = vmatprep.subr.mxu0 0.0
        %1380 = vmatpush1.msra.mxu0 0.0
        %1381 = vmatprep.subr.mxu0 0.0
        %1382 = vmatpush1.msra.mxu0 0.0
        %1383 = vmatprep.subr.mxu0 %v1351
        %1384 = vmatpush1.msra.mxu0 %v1348
        %1385 = vmatprep.subr.mxu0 0.0
        %1386 = vmatpush2.msra.mxu0 0.0
        %1387 = vmatprep.subr.mxu0 0.0
        %1388 = vmatpush2.msra.mxu0 0.0
        %1389 = vmatprep.subr.mxu0 0.0
        %1390 = vmatpush2.msra.mxu0 0.0
        %1391 = vmatprep.subr.mxu0 0.0
        %1392 = vmatpush2.msra.mxu0 0.0
        %1393 = vmatprep.subr.mxu0 0.0
        %1394 = vmatpush2.msra.mxu0 0.0
        %1395 = vmatprep.subr.mxu0 0.0
        %1396 = vmatpush2.msra.mxu0 0.0
        %1397 = vmatprep.subr.mxu0 0.0
        %1398 = vmatpush2.msra.mxu0 0.0
        %1399 = vmatprep.subr.mxu0 0.0
        %1400 = vmatpush2.msra.mxu0 0.0
        %1401 = vmatprep.subr.mxu0 0.0
        %1402 = vmatpush2.msra.mxu0 0.0
        %1403 = vmatprep.subr.mxu0 0.0
        %1404 = vmatpush2.msra.mxu0 0.0
        %1405 = vmatprep.subr.mxu0 0.0
        %1406 = vmatpush2.msra.mxu0 0.0
        %1407 = vmatprep.subr.mxu0 0.0
        %1408 = vmatpush2.msra.mxu0 0.0
        %1409 = vmatprep.subr.mxu0 0.0
        %1410 = vmatpush2.msra.mxu0 0.0
        %1411 = vmatprep.subr.mxu0 0.0
        %1412 = vmatpush2.msra.mxu0 0.0
        %1413 = vmatprep.subr.mxu0 0.0
        %1414 = vmatpush2.msra.mxu0 0.0
        %1415 = vmatprep.subr.mxu0 0.0
        %1416 = vmatpush2.msra.mxu0 0.0
        %1417 = vmatprep.mubr.f32.mxu0 0.0
        %1418 = vmatmul.mubr.f32.gmra.mxu0 %v1345
        %v1419 = vpop.f32.mrf.mxu0
        %v1420 = vadd.f32 %v1342, %v1419
        %v1421 = vpop.f32.mrf.mxu0
        %v1422 = vadd.f32 %v1342, %v1421
        %1423 = vdwg.mxu0
        %v1426 = vcombine.low %v1420, %v1422
        %v1428 = vadd.f32 %v305, %v1426
        %1429 = vst [vmem:[%s298] sm:$0xff] %v1428
        %s1430 = sand.u32 %s203, 1
        %s1431 = scalar_lea.sflag [#allocation3], %s1430
        %s1432 = sand.u32 %s203, 1
        %s1433 = smul.addr %s1432, 8
        %s1434 = scalar_lea.vmem [#allocation2], %s1433
        // Predicated region
        $region53: #{tpu_custom_call.1} parent=51 // pred_check
          %p1435 = pneg %p213
        $region54: #{tpu_custom_call.1} parent=51 // pred_check_branch
          %1437 = sbr.rel (%p1435) target = $region56
        $region55: #{tpu_custom_call.1} parent=51 // pred_region
          %s1439 = ssub.s32 128, 128
          %1440 = vsyncadd %s1431, %s1439
          %s1441 = smul.addr %s22, 2
          %s1442 = smul.addr %s1441, 64
          %s1443 = scalar_lea.hbm %s8, %s1442
          %s1445 = sshll.u32 %s1434, 4
          %s1446 = int_to_ptr.vmem [resolvable:$true] %s1445
          %1448 = dma.vmem_to_hbm [thread:$0]  %s1446, 128, %s1443, %s1431
        $region56: #{tpu_custom_call.1} parent=51 // pred_fallthru
          _
      $region52: #{tpu_custom_call.1} parent=5 // pred_fallthru
        _
      %p1449 = scmp.le.s32.totalorder 2, %s17
      // Predicated region
      $region57: #{tpu_custom_call.1} parent=5 // pred_check
        %p1450 = pneg %p1449
      $region58: #{tpu_custom_call.1} parent=5 // pred_check_branch
        %1452 = sbr.rel (%p1450) target = $region60
      $region59: #{tpu_custom_call.1} parent=5 // pred_region
        %s1453 = ssub.s32 %s17, 2
        // Predicated region
        $region61: #{tpu_custom_call.1} parent=59 // pred_check
          %p1454 = pneg %p219
        $region62: #{tpu_custom_call.1} parent=59 // pred_check_branch
          %1456 = sbr.rel (%p1454) target = $region64
        $region63: #{tpu_custom_call.1} parent=59 // pred_region
          %s1457 = sand.u32 %s204, 1
          %s1458 = scalar_lea.sflag [#allocation3], %s1457
          %s1459 = sand.u32 %s204, 1
          %s1460 = smul.addr %s1459, 8
          %s1461 = scalar_lea.vmem [#allocation2], %s1460
          %1462 = dma.done %s1458, 128
        $region64: #{tpu_custom_call.1} parent=59 // pred_fallthru
          _
      $region60: #{tpu_custom_call.1} parent=5 // pred_fallthru
        _
    $region6: #{tpu_custom_call.1} parent=1 // loop_footer
      %s21 = sadd.s32 1, %s17
    $region7: #{tpu_custom_call.1} parent=1 // loop_footer_branch
      %16 = sbr.rel target = $region3
    $region8: #{tpu_custom_call.1} parent=1 // loop_exit
      _
    %1463 = vsyncpa [#allocation3], 1
    %s1464 = scalar_lea.sflag [#allocation3], 1
    %1465 = vsyncpa %s1464, 1

</llo_original>
